<compile_context>
chip_gen: v6e
topology: v6e:2x2x1
jax: 0.10.0
libtpu: 0.0.40
codegen_flags: <defaults>
</compile_context>

<pallas_src>
import functools

import jax
import jax.numpy as jnp
from jax import lax
from jax.experimental import pallas as pl
from jax.experimental.pallas import tpu as pltpu


_MASK_VALUE = -1000000.0          # matches the PyTorch masked_softmax sentinel


def _additive_attn_kernel(qp_ref, kpt_ref, v_ref, vlen_ref, wv_ref,
                          out_ref, attn_ref, *, compute_dtype):
    # Blocks: qp (bt,Q,H), kpt (bt,H,K), v (bt,K,Dv), vlen (bt,Q,1) int32,
    #         wv (H,) float32 in SMEM.  Outputs: out (bt,Q,Dv), attn (bt,Q,K).
    bt, q_len, n_hidden = qp_ref.shape
    k_len = kpt_ref.shape[2]

    def per_batch(i, carry):
        qp = qp_ref[i].astype(compute_dtype)      # (Q, H)
        kpt = kpt_ref[i].astype(compute_dtype)    # (H, K)  (keys pre-transposed)
        v = v_ref[i]                              # (K, Dv) float32
        vlen = vlen_ref[i]                        # (Q, 1)  int32

        # scores[q,k] = sum_h w_v[h] * tanh(qp[q,h] + kp[k,h]), accumulated over
        # H as lane-dense (Q,K) tiles: no (Q,K,H) intermediate, no XLU reduce.
        scores = jnp.zeros((q_len, k_len), jnp.float32)
        for h in range(n_hidden):                                   # H is static
            t = jnp.tanh(qp[:, h:h + 1] + kpt[h:h + 1, :])          # (Q,K) on EUP
            scores = scores + wv_ref[h] * t.astype(jnp.float32)     # VPU fma

        # Masked softmax over K (mask value matches the PyTorch reference).
        col = lax.broadcasted_iota(jnp.int32, (q_len, k_len), 1)
        scores = jnp.where(col < vlen, scores, _MASK_VALUE)
        m = jnp.max(scores, axis=-1, keepdims=True)
        e = jnp.exp(scores - m)
        attn = e * pl.reciprocal(jnp.sum(e, axis=-1, keepdims=True), approx=True)

        attn_ref[i] = attn
        # TODO(synk): dropout is identity (p=0 / eval mode); no stochastic mask.
        out_ref[i] = jnp.dot(attn, v, preferred_element_type=jnp.float32)
        return carry

    # Not unrolled: keeps the per-batch live set to one (Q,K) tile (review).
    lax.fori_loop(0, bt, per_batch, 0)


def _vmem_caps():
    """(tiling budget, vmem_limit_bytes) from the local TPU generation; the
    fallback (64 MiB physical) is safe on every generation including v7x."""
    cap = 64 << 20
    try:
        info = pltpu.get_tpu_info()
        cap = int(getattr(info, "vmem_capacity_bytes", cap) or cap)
    except Exception:
        pass
    return int(cap * 0.70), int(cap * 0.80)


def _choose_block_b(B, Q, K, H, Dv, budget_bytes):
    """Largest batch tile that divides B, fits the double-buffered VMEM budget,
    and still leaves >= 2 grid steps (keeps both v7x TensorCores busy)."""
    pad = lambda n, m: -(-n // m) * m
    tile = lambda r, c: 4 * pad(r, 8) * pad(c, 128)          # padded f32 tile bytes
    per_b = (2 * (tile(Q, H) + tile(H, K) + tile(K, Dv) + tile(Q, 1))   # inputs x2
             + 2 * (tile(Q, Dv) + tile(Q, K))                           # outputs x2
             + 4 * tile(Q, K))                                          # live tiles
    bt = max(1, min(B, budget_bytes // max(per_b, 1)))
    if B >= 2:
        bt = max(1, min(bt, B // 2))       # grid >= 2 steps for megacore sharding
    while B % bt:
        bt -= 1
    return bt


def additive_attention(queries, keys, values, valid_lens, w_q, w_k, w_v,
                       *, compute_dtype=jnp.float32):
    """queries (B,Q,Dq), keys (B,K,Dk), values (B,K,Dv), valid_lens (B,)/(B,Q).
    w_q:(H,Dq) w_k:(H,Dk) w_v:(1,H) (nn.Linear layout).  Returns
    (output (B,Q,Dv), attention_weights (B,Q,K)).
    compute_dtype=jnp.bfloat16 halves the tanh/add cost on v6e/v7x; keep
    float32 on v5e (no bf16 VPU/EUP)."""
    B, Q, _ = queries.shape
    _, K, _ = keys.shape
    _, _, Dv = values.shape
    H = w_q.shape[0]
    hp = jax.lax.Precision.HIGHEST

    # Hoisted projections: two large batched matmuls (full MXU tiles, weights
    # transposed once).  Keys go straight to (B,H,K) so the per-h key row in
    # the kernel is a free sublane broadcast.
    qp = jnp.einsum('bqd,hd->bqh', queries, w_q, precision=hp)
    kpt = jnp.einsum('bkd,hd->bhk', keys, w_k, precision=hp)

    # valid_lens: (B,) or per-query (B,Q) -> (B,Q,1) int32 (same semantics as
    # torch.repeat_interleave in masked_softmax).
    if valid_lens.ndim == 1:
        vlen = jnp.broadcast_to(valid_lens[:, None], (B, Q))
    else:
        vlen = valid_lens
    vlen = vlen.astype(jnp.int32).reshape(B, Q, 1)

    wv_vec = w_v.reshape(H).astype(jnp.float32)            # lives in SMEM

    budget, vmem_limit = _vmem_caps()
    bt = _choose_block_b(B, Q, K, H, Dv, budget)
    grid = (B // bt,)

    # Advisory cost estimate for the Pallas call (projections excluded).
    flops = B * Q * K * (3 * H + 5) + 2 * B * Q * K * Dv
    transcendentals = B * Q * K * (H + 1)                   # tanh + exp
    bytes_accessed = 4 * (qp.size + kpt.size + values.size + wv_vec.size
                          + vlen.size + B * Q * Dv + B * Q * K)

    kernel = functools.partial(_additive_attn_kernel, compute_dtype=compute_dtype)

    out, attn = pl.pallas_call(
        kernel,
        grid_spec=pltpu.PrefetchScalarGridSpec(
            num_scalar_prefetch=0,
            grid=grid,
            in_specs=[
                pl.BlockSpec((bt, Q, H), lambda b: (b, 0, 0)),
                pl.BlockSpec((bt, H, K), lambda b: (b, 0, 0)),
                pl.BlockSpec((bt, K, Dv), lambda b: (b, 0, 0)),
                pl.BlockSpec((bt, Q, 1), lambda b: (b, 0, 0)),
                pl.BlockSpec(memory_space=pltpu.MemorySpace.SMEM),
            ],
            out_specs=[
                pl.BlockSpec((bt, Q, Dv), lambda b: (b, 0, 0)),
                pl.BlockSpec((bt, Q, K), lambda b: (b, 0, 0)),
            ],
        ),
        out_shape=(
            jax.ShapeDtypeStruct((B, Q, Dv), jnp.float32),
            jax.ShapeDtypeStruct((B, Q, K), jnp.float32),
        ),
        compiler_params=pltpu.CompilerParams(
            dimension_semantics=("parallel",),
            vmem_limit_bytes=vmem_limit),
        cost_estimate=pl.CostEstimate(
            flops=flops,
            transcendentals=transcendentals,
            bytes_accessed=bytes_accessed),
    )(qp, kpt, values, vlen, wv_vec)
    return out, attn


def _reference(queries, keys, values, valid_lens, w_q, w_k, w_v):
    hp = jax.lax.Precision.HIGHEST
    qp = jnp.einsum('bqd,hd->bqh', queries, w_q, precision=hp)
    kp = jnp.einsum('bkd,hd->bkh', keys, w_k, precision=hp)
    feats = jnp.tanh(qp[:, :, None, :] + kp[:, None, :, :])
    scores = jnp.einsum('bqkh,h->bqk', feats, w_v[0], precision=hp)
    if valid_lens.ndim == 1:
        vl = jnp.broadcast_to(valid_lens[:, None], scores.shape[:2])
    else:
        vl = valid_lens
    col = jnp.arange(scores.shape[-1])[None, None, :]
    scores = jnp.where(col < vl[:, :, None], scores, _MASK_VALUE)
    attn = jax.nn.softmax(scores, axis=-1)
    return jnp.einsum('bqk,bkv->bqv', attn, values, precision=hp), attn


if __name__ == "__main__":
    B, Q, K = 2, 4, 8
    query_size, key_size, num_hiddens, value_dim = 12, 16, 32, 24

    root = jax.random.PRNGKey(0)
    kq, kk, kv, kwq, kwk, kwv = jax.random.split(root, 6)

    queries = jax.random.normal(kq, (B, Q, query_size), dtype=jnp.float32)
    keys = jax.random.normal(kk, (B, K, key_size), dtype=jnp.float32)
    values = jax.random.normal(kv, (B, K, value_dim), dtype=jnp.float32)
    valid_lens = jnp.array([3, 6], dtype=jnp.int32)

    # Deterministic parameter init (nn.Linear weight shapes: (out, in)).
    w_q = 0.1 * jax.random.normal(kwq, (num_hiddens, query_size), dtype=jnp.float32)
    w_k = 0.1 * jax.random.normal(kwk, (num_hiddens, key_size), dtype=jnp.float32)
    w_v = 0.1 * jax.random.normal(kwv, (1, num_hiddens), dtype=jnp.float32)

    # Tolerance absorbs the in-kernel MXU matmul (attn @ V) running at hardware
    # matmul precision while the reference einsums use Precision.HIGHEST.
    tol = dict(atol=2e-2, rtol=2e-2)

    # (B,) valid_lens path.
    out, attn = additive_attention(queries, keys, values, valid_lens, w_q, w_k, w_v)
    out, attn = jax.block_until_ready((out, attn))
    ref_out, ref_attn = _reference(queries, keys, values, valid_lens, w_q, w_k, w_v)
    assert out.shape == (B, Q, value_dim) and attn.shape == (B, Q, K)
    assert jnp.allclose(attn, ref_attn, **tol), "attention mismatch"
    assert jnp.allclose(out, ref_out, **tol), "output mismatch"

    # Per-query (B, Q) valid_lens path.
    vlen2d = jnp.array([[1, 2, 3, 4], [5, 6, 7, 8]], dtype=jnp.int32)
    out2, attn2 = additive_attention(queries, keys, values, vlen2d, w_q, w_k, w_v)
    out2, attn2 = jax.block_until_ready((out2, attn2))
    ref_out2, ref_attn2 = _reference(queries, keys, values, vlen2d, w_q, w_k, w_v)
    assert jnp.allclose(attn2, ref_attn2, **tol), "attention mismatch (2D lens)"
    assert jnp.allclose(out2, ref_out2, **tol), "output mismatch (2D lens)"

    print("KERNEL_OK")
</pallas_src>

<mosaic_0001>
module attributes {stable_mosaic.version = 11 : i64} {
  func.func @_additive_attn_kernel(%arg0: i32, %arg1: memref<1x4x32xf32, #tpu.memory_space<vmem>>, %arg2: memref<1x32x8xf32, #tpu.memory_space<vmem>>, %arg3: memref<1x8x24xf32, #tpu.memory_space<vmem>>, %arg4: memref<1x4x1xi32, #tpu.memory_space<vmem>>, %arg5: memref<32xf32, #tpu.memory_space<smem>>, %arg6: memref<1x4x24xf32, #tpu.memory_space<vmem>>, %arg7: memref<1x4x8xf32, #tpu.memory_space<vmem>>) attributes {dimension_semantics = [#tpu.dimension_semantics<parallel>], iteration_bounds = array<i64: 2>, scalar_prefetch = 0 : i64, scratch_operands = 0 : i64, tpu.core_type = #tpu.core_type<tc>, window_params = [{transform_indices = @transform_0, window_bounds = array<i64: 1, 4, 32>}, {transform_indices = @transform_1, window_bounds = array<i64: 1, 32, 8>}, {transform_indices = @transform_2, window_bounds = array<i64: 1, 8, 24>}, {transform_indices = @transform_3, window_bounds = array<i64: 1, 4, 1>}, {transform_indices = @transform_4, window_bounds = array<i64: 32>}, {transform_indices = @transform_5, window_bounds = array<i64: 1, 4, 24>}, {transform_indices = @transform_6, window_bounds = array<i64: 1, 4, 8>}]} {
    %c0_i32 = arith.constant 0 : i32
    %0 = arith.index_cast %c0_i32 : i32 to index
    %c0 = arith.constant 0 : index
    %c0_0 = arith.constant 0 : index
    %1 = vector.load %arg1[%0, %c0, %c0_0] : memref<1x4x32xf32, #tpu.memory_space<vmem>>, vector<1x4x32xf32>
    %2 = vector.shape_cast %1 : vector<1x4x32xf32> to vector<4x32xf32>
    %3 = arith.index_cast %c0_i32 : i32 to index
    %c0_1 = arith.constant 0 : index
    %c0_2 = arith.constant 0 : index
    %4 = vector.load %arg2[%3, %c0_1, %c0_2] : memref<1x32x8xf32, #tpu.memory_space<vmem>>, vector<1x32x8xf32>
    %5 = vector.shape_cast %4 : vector<1x32x8xf32> to vector<32x8xf32>
    %6 = arith.index_cast %c0_i32 : i32 to index
    %c0_3 = arith.constant 0 : index
    %c0_4 = arith.constant 0 : index
    %7 = vector.load %arg3[%6, %c0_3, %c0_4] : memref<1x8x24xf32, #tpu.memory_space<vmem>>, vector<1x8x24xf32>
    %8 = vector.shape_cast %7 : vector<1x8x24xf32> to vector<8x24xf32>
    %9 = arith.index_cast %c0_i32 : i32 to index
    %c0_5 = arith.constant 0 : index
    %c0_6 = arith.constant 0 : index
    %10 = vector.load %arg4[%9, %c0_5, %c0_6] : memref<1x4x1xi32, #tpu.memory_space<vmem>>, vector<1x4x1xi32>
    %11 = vector.shape_cast %10 : vector<1x4x1xi32> to vector<4x1xi32>
    %cst = arith.constant 0.000000e+00 : f32
    %12 = vector.broadcast %cst : f32 to vector<4x8xf32>
    %13 = vector.extract_strided_slice %2 {offsets = [0, 0], sizes = [4, 1], strides = [1, 1]} : vector<4x32xf32> to vector<4x1xf32>
    %14 = vector.extract_strided_slice %5 {offsets = [0, 0], sizes = [1, 8], strides = [1, 1]} : vector<32x8xf32> to vector<1x8xf32>
    %15 = vector.broadcast %13 : vector<4x1xf32> to vector<4x8xf32>
    %16 = vector.broadcast %14 : vector<1x8xf32> to vector<4x8xf32>
    %17 = arith.addf %15, %16 : vector<4x8xf32>
    %18 = math.tanh %17 : vector<4x8xf32>
    %c0_7 = arith.constant 0 : index
    %19 = memref.load %arg5[%c0_7] : memref<32xf32, #tpu.memory_space<smem>>
    %20 = vector.broadcast %19 : f32 to vector<4x8xf32>
    %21 = arith.mulf %20, %18 : vector<4x8xf32>
    %22 = arith.addf %12, %21 : vector<4x8xf32>
    %23 = vector.extract_strided_slice %2 {offsets = [0, 1], sizes = [4, 1], strides = [1, 1]} : vector<4x32xf32> to vector<4x1xf32>
    %24 = vector.extract_strided_slice %5 {offsets = [1, 0], sizes = [1, 8], strides = [1, 1]} : vector<32x8xf32> to vector<1x8xf32>
    %25 = vector.broadcast %23 : vector<4x1xf32> to vector<4x8xf32>
    %26 = vector.broadcast %24 : vector<1x8xf32> to vector<4x8xf32>
    %27 = arith.addf %25, %26 : vector<4x8xf32>
    %28 = math.tanh %27 : vector<4x8xf32>
    %c1 = arith.constant 1 : index
    %29 = memref.load %arg5[%c1] : memref<32xf32, #tpu.memory_space<smem>>
    %30 = vector.broadcast %29 : f32 to vector<4x8xf32>
    %31 = arith.mulf %30, %28 : vector<4x8xf32>
    %32 = arith.addf %22, %31 : vector<4x8xf32>
    %33 = vector.extract_strided_slice %2 {offsets = [0, 2], sizes = [4, 1], strides = [1, 1]} : vector<4x32xf32> to vector<4x1xf32>
    %34 = vector.extract_strided_slice %5 {offsets = [2, 0], sizes = [1, 8], strides = [1, 1]} : vector<32x8xf32> to vector<1x8xf32>
    %35 = vector.broadcast %33 : vector<4x1xf32> to vector<4x8xf32>
    %36 = vector.broadcast %34 : vector<1x8xf32> to vector<4x8xf32>
    %37 = arith.addf %35, %36 : vector<4x8xf32>
    %38 = math.tanh %37 : vector<4x8xf32>
    %c2 = arith.constant 2 : index
    %39 = memref.load %arg5[%c2] : memref<32xf32, #tpu.memory_space<smem>>
    %40 = vector.broadcast %39 : f32 to vector<4x8xf32>
    %41 = arith.mulf %40, %38 : vector<4x8xf32>
    %42 = arith.addf %32, %41 : vector<4x8xf32>
    %43 = vector.extract_strided_slice %2 {offsets = [0, 3], sizes = [4, 1], strides = [1, 1]} : vector<4x32xf32> to vector<4x1xf32>
    %44 = vector.extract_strided_slice %5 {offsets = [3, 0], sizes = [1, 8], strides = [1, 1]} : vector<32x8xf32> to vector<1x8xf32>
    %45 = vector.broadcast %43 : vector<4x1xf32> to vector<4x8xf32>
    %46 = vector.broadcast %44 : vector<1x8xf32> to vector<4x8xf32>
    %47 = arith.addf %45, %46 : vector<4x8xf32>
    %48 = math.tanh %47 : vector<4x8xf32>
    %c3 = arith.constant 3 : index
    %49 = memref.load %arg5[%c3] : memref<32xf32, #tpu.memory_space<smem>>
    %50 = vector.broadcast %49 : f32 to vector<4x8xf32>
    %51 = arith.mulf %50, %48 : vector<4x8xf32>
    %52 = arith.addf %42, %51 : vector<4x8xf32>
    %53 = vector.extract_strided_slice %2 {offsets = [0, 4], sizes = [4, 1], strides = [1, 1]} : vector<4x32xf32> to vector<4x1xf32>
    %54 = vector.extract_strided_slice %5 {offsets = [4, 0], sizes = [1, 8], strides = [1, 1]} : vector<32x8xf32> to vector<1x8xf32>
    %55 = vector.broadcast %53 : vector<4x1xf32> to vector<4x8xf32>
    %56 = vector.broadcast %54 : vector<1x8xf32> to vector<4x8xf32>
    %57 = arith.addf %55, %56 : vector<4x8xf32>
    %58 = math.tanh %57 : vector<4x8xf32>
    %c4 = arith.constant 4 : index
    %59 = memref.load %arg5[%c4] : memref<32xf32, #tpu.memory_space<smem>>
    %60 = vector.broadcast %59 : f32 to vector<4x8xf32>
    %61 = arith.mulf %60, %58 : vector<4x8xf32>
    %62 = arith.addf %52, %61 : vector<4x8xf32>
    %63 = vector.extract_strided_slice %2 {offsets = [0, 5], sizes = [4, 1], strides = [1, 1]} : vector<4x32xf32> to vector<4x1xf32>
    %64 = vector.extract_strided_slice %5 {offsets = [5, 0], sizes = [1, 8], strides = [1, 1]} : vector<32x8xf32> to vector<1x8xf32>
    %65 = vector.broadcast %63 : vector<4x1xf32> to vector<4x8xf32>
    %66 = vector.broadcast %64 : vector<1x8xf32> to vector<4x8xf32>
    %67 = arith.addf %65, %66 : vector<4x8xf32>
    %68 = math.tanh %67 : vector<4x8xf32>
    %c5 = arith.constant 5 : index
    %69 = memref.load %arg5[%c5] : memref<32xf32, #tpu.memory_space<smem>>
    %70 = vector.broadcast %69 : f32 to vector<4x8xf32>
    %71 = arith.mulf %70, %68 : vector<4x8xf32>
    %72 = arith.addf %62, %71 : vector<4x8xf32>
    %73 = vector.extract_strided_slice %2 {offsets = [0, 6], sizes = [4, 1], strides = [1, 1]} : vector<4x32xf32> to vector<4x1xf32>
    %74 = vector.extract_strided_slice %5 {offsets = [6, 0], sizes = [1, 8], strides = [1, 1]} : vector<32x8xf32> to vector<1x8xf32>
    %75 = vector.broadcast %73 : vector<4x1xf32> to vector<4x8xf32>
    %76 = vector.broadcast %74 : vector<1x8xf32> to vector<4x8xf32>
    %77 = arith.addf %75, %76 : vector<4x8xf32>
    %78 = math.tanh %77 : vector<4x8xf32>
    %c6 = arith.constant 6 : index
    %79 = memref.load %arg5[%c6] : memref<32xf32, #tpu.memory_space<smem>>
    %80 = vector.broadcast %79 : f32 to vector<4x8xf32>
    %81 = arith.mulf %80, %78 : vector<4x8xf32>
    %82 = arith.addf %72, %81 : vector<4x8xf32>
    %83 = vector.extract_strided_slice %2 {offsets = [0, 7], sizes = [4, 1], strides = [1, 1]} : vector<4x32xf32> to vector<4x1xf32>
    %84 = vector.extract_strided_slice %5 {offsets = [7, 0], sizes = [1, 8], strides = [1, 1]} : vector<32x8xf32> to vector<1x8xf32>
    %85 = vector.broadcast %83 : vector<4x1xf32> to vector<4x8xf32>
    %86 = vector.broadcast %84 : vector<1x8xf32> to vector<4x8xf32>
    %87 = arith.addf %85, %86 : vector<4x8xf32>
    %88 = math.tanh %87 : vector<4x8xf32>
    %c7 = arith.constant 7 : index
    %89 = memref.load %arg5[%c7] : memref<32xf32, #tpu.memory_space<smem>>
    %90 = vector.broadcast %89 : f32 to vector<4x8xf32>
    %91 = arith.mulf %90, %88 : vector<4x8xf32>
    %92 = arith.addf %82, %91 : vector<4x8xf32>
    %93 = vector.extract_strided_slice %2 {offsets = [0, 8], sizes = [4, 1], strides = [1, 1]} : vector<4x32xf32> to vector<4x1xf32>
    %94 = vector.extract_strided_slice %5 {offsets = [8, 0], sizes = [1, 8], strides = [1, 1]} : vector<32x8xf32> to vector<1x8xf32>
    %95 = vector.broadcast %93 : vector<4x1xf32> to vector<4x8xf32>
    %96 = vector.broadcast %94 : vector<1x8xf32> to vector<4x8xf32>
    %97 = arith.addf %95, %96 : vector<4x8xf32>
    %98 = math.tanh %97 : vector<4x8xf32>
    %c8 = arith.constant 8 : index
    %99 = memref.load %arg5[%c8] : memref<32xf32, #tpu.memory_space<smem>>
    %100 = vector.broadcast %99 : f32 to vector<4x8xf32>
    %101 = arith.mulf %100, %98 : vector<4x8xf32>
    %102 = arith.addf %92, %101 : vector<4x8xf32>
    %103 = vector.extract_strided_slice %2 {offsets = [0, 9], sizes = [4, 1], strides = [1, 1]} : vector<4x32xf32> to vector<4x1xf32>
    %104 = vector.extract_strided_slice %5 {offsets = [9, 0], sizes = [1, 8], strides = [1, 1]} : vector<32x8xf32> to vector<1x8xf32>
    %105 = vector.broadcast %103 : vector<4x1xf32> to vector<4x8xf32>
    %106 = vector.broadcast %104 : vector<1x8xf32> to vector<4x8xf32>
    %107 = arith.addf %105, %106 : vector<4x8xf32>
    %108 = math.tanh %107 : vector<4x8xf32>
    %c9 = arith.constant 9 : index
    %109 = memref.load %arg5[%c9] : memref<32xf32, #tpu.memory_space<smem>>
    %110 = vector.broadcast %109 : f32 to vector<4x8xf32>
    %111 = arith.mulf %110, %108 : vector<4x8xf32>
    %112 = arith.addf %102, %111 : vector<4x8xf32>
    %113 = vector.extract_strided_slice %2 {offsets = [0, 10], sizes = [4, 1], strides = [1, 1]} : vector<4x32xf32> to vector<4x1xf32>
    %114 = vector.extract_strided_slice %5 {offsets = [10, 0], sizes = [1, 8], strides = [1, 1]} : vector<32x8xf32> to vector<1x8xf32>
    %115 = vector.broadcast %113 : vector<4x1xf32> to vector<4x8xf32>
    %116 = vector.broadcast %114 : vector<1x8xf32> to vector<4x8xf32>
    %117 = arith.addf %115, %116 : vector<4x8xf32>
    %118 = math.tanh %117 : vector<4x8xf32>
    %c10 = arith.constant 10 : index
    %119 = memref.load %arg5[%c10] : memref<32xf32, #tpu.memory_space<smem>>
    %120 = vector.broadcast %119 : f32 to vector<4x8xf32>
    %121 = arith.mulf %120, %118 : vector<4x8xf32>
    %122 = arith.addf %112, %121 : vector<4x8xf32>
    %123 = vector.extract_strided_slice %2 {offsets = [0, 11], sizes = [4, 1], strides = [1, 1]} : vector<4x32xf32> to vector<4x1xf32>
    %124 = vector.extract_strided_slice %5 {offsets = [11, 0], sizes = [1, 8], strides = [1, 1]} : vector<32x8xf32> to vector<1x8xf32>
    %125 = vector.broadcast %123 : vector<4x1xf32> to vector<4x8xf32>
    %126 = vector.broadcast %124 : vector<1x8xf32> to vector<4x8xf32>
    %127 = arith.addf %125, %126 : vector<4x8xf32>
    %128 = math.tanh %127 : vector<4x8xf32>
    %c11 = arith.constant 11 : index
    %129 = memref.load %arg5[%c11] : memref<32xf32, #tpu.memory_space<smem>>
    %130 = vector.broadcast %129 : f32 to vector<4x8xf32>
    %131 = arith.mulf %130, %128 : vector<4x8xf32>
    %132 = arith.addf %122, %131 : vector<4x8xf32>
    %133 = vector.extract_strided_slice %2 {offsets = [0, 12], sizes = [4, 1], strides = [1, 1]} : vector<4x32xf32> to vector<4x1xf32>
    %134 = vector.extract_strided_slice %5 {offsets = [12, 0], sizes = [1, 8], strides = [1, 1]} : vector<32x8xf32> to vector<1x8xf32>
    %135 = vector.broadcast %133 : vector<4x1xf32> to vector<4x8xf32>
    %136 = vector.broadcast %134 : vector<1x8xf32> to vector<4x8xf32>
    %137 = arith.addf %135, %136 : vector<4x8xf32>
    %138 = math.tanh %137 : vector<4x8xf32>
    %c12 = arith.constant 12 : index
    %139 = memref.load %arg5[%c12] : memref<32xf32, #tpu.memory_space<smem>>
    %140 = vector.broadcast %139 : f32 to vector<4x8xf32>
    %141 = arith.mulf %140, %138 : vector<4x8xf32>
    %142 = arith.addf %132, %141 : vector<4x8xf32>
    %143 = vector.extract_strided_slice %2 {offsets = [0, 13], sizes = [4, 1], strides = [1, 1]} : vector<4x32xf32> to vector<4x1xf32>
    %144 = vector.extract_strided_slice %5 {offsets = [13, 0], sizes = [1, 8], strides = [1, 1]} : vector<32x8xf32> to vector<1x8xf32>
    %145 = vector.broadcast %143 : vector<4x1xf32> to vector<4x8xf32>
    %146 = vector.broadcast %144 : vector<1x8xf32> to vector<4x8xf32>
    %147 = arith.addf %145, %146 : vector<4x8xf32>
    %148 = math.tanh %147 : vector<4x8xf32>
    %c13 = arith.constant 13 : index
    %149 = memref.load %arg5[%c13] : memref<32xf32, #tpu.memory_space<smem>>
    %150 = vector.broadcast %149 : f32 to vector<4x8xf32>
    %151 = arith.mulf %150, %148 : vector<4x8xf32>
    %152 = arith.addf %142, %151 : vector<4x8xf32>
    %153 = vector.extract_strided_slice %2 {offsets = [0, 14], sizes = [4, 1], strides = [1, 1]} : vector<4x32xf32> to vector<4x1xf32>
    %154 = vector.extract_strided_slice %5 {offsets = [14, 0], sizes = [1, 8], strides = [1, 1]} : vector<32x8xf32> to vector<1x8xf32>
    %155 = vector.broadcast %153 : vector<4x1xf32> to vector<4x8xf32>
    %156 = vector.broadcast %154 : vector<1x8xf32> to vector<4x8xf32>
    %157 = arith.addf %155, %156 : vector<4x8xf32>
    %158 = math.tanh %157 : vector<4x8xf32>
    %c14 = arith.constant 14 : index
    %159 = memref.load %arg5[%c14] : memref<32xf32, #tpu.memory_space<smem>>
    %160 = vector.broadcast %159 : f32 to vector<4x8xf32>
    %161 = arith.mulf %160, %158 : vector<4x8xf32>
    %162 = arith.addf %152, %161 : vector<4x8xf32>
    %163 = vector.extract_strided_slice %2 {offsets = [0, 15], sizes = [4, 1], strides = [1, 1]} : vector<4x32xf32> to vector<4x1xf32>
    %164 = vector.extract_strided_slice %5 {offsets = [15, 0], sizes = [1, 8], strides = [1, 1]} : vector<32x8xf32> to vector<1x8xf32>
    %165 = vector.broadcast %163 : vector<4x1xf32> to vector<4x8xf32>
    %166 = vector.broadcast %164 : vector<1x8xf32> to vector<4x8xf32>
    %167 = arith.addf %165, %166 : vector<4x8xf32>
    %168 = math.tanh %167 : vector<4x8xf32>
    %c15 = arith.constant 15 : index
    %169 = memref.load %arg5[%c15] : memref<32xf32, #tpu.memory_space<smem>>
    %170 = vector.broadcast %169 : f32 to vector<4x8xf32>
    %171 = arith.mulf %170, %168 : vector<4x8xf32>
    %172 = arith.addf %162, %171 : vector<4x8xf32>
    %173 = vector.extract_strided_slice %2 {offsets = [0, 16], sizes = [4, 1], strides = [1, 1]} : vector<4x32xf32> to vector<4x1xf32>
    %174 = vector.extract_strided_slice %5 {offsets = [16, 0], sizes = [1, 8], strides = [1, 1]} : vector<32x8xf32> to vector<1x8xf32>
    %175 = vector.broadcast %173 : vector<4x1xf32> to vector<4x8xf32>
    %176 = vector.broadcast %174 : vector<1x8xf32> to vector<4x8xf32>
    %177 = arith.addf %175, %176 : vector<4x8xf32>
    %178 = math.tanh %177 : vector<4x8xf32>
    %c16 = arith.constant 16 : index
    %179 = memref.load %arg5[%c16] : memref<32xf32, #tpu.memory_space<smem>>
    %180 = vector.broadcast %179 : f32 to vector<4x8xf32>
    %181 = arith.mulf %180, %178 : vector<4x8xf32>
    %182 = arith.addf %172, %181 : vector<4x8xf32>
    %183 = vector.extract_strided_slice %2 {offsets = [0, 17], sizes = [4, 1], strides = [1, 1]} : vector<4x32xf32> to vector<4x1xf32>
    %184 = vector.extract_strided_slice %5 {offsets = [17, 0], sizes = [1, 8], strides = [1, 1]} : vector<32x8xf32> to vector<1x8xf32>
    %185 = vector.broadcast %183 : vector<4x1xf32> to vector<4x8xf32>
    %186 = vector.broadcast %184 : vector<1x8xf32> to vector<4x8xf32>
    %187 = arith.addf %185, %186 : vector<4x8xf32>
    %188 = math.tanh %187 : vector<4x8xf32>
    %c17 = arith.constant 17 : index
    %189 = memref.load %arg5[%c17] : memref<32xf32, #tpu.memory_space<smem>>
    %190 = vector.broadcast %189 : f32 to vector<4x8xf32>
    %191 = arith.mulf %190, %188 : vector<4x8xf32>
    %192 = arith.addf %182, %191 : vector<4x8xf32>
    %193 = vector.extract_strided_slice %2 {offsets = [0, 18], sizes = [4, 1], strides = [1, 1]} : vector<4x32xf32> to vector<4x1xf32>
    %194 = vector.extract_strided_slice %5 {offsets = [18, 0], sizes = [1, 8], strides = [1, 1]} : vector<32x8xf32> to vector<1x8xf32>
    %195 = vector.broadcast %193 : vector<4x1xf32> to vector<4x8xf32>
    %196 = vector.broadcast %194 : vector<1x8xf32> to vector<4x8xf32>
    %197 = arith.addf %195, %196 : vector<4x8xf32>
    %198 = math.tanh %197 : vector<4x8xf32>
    %c18 = arith.constant 18 : index
    %199 = memref.load %arg5[%c18] : memref<32xf32, #tpu.memory_space<smem>>
    %200 = vector.broadcast %199 : f32 to vector<4x8xf32>
    %201 = arith.mulf %200, %198 : vector<4x8xf32>
    %202 = arith.addf %192, %201 : vector<4x8xf32>
    %203 = vector.extract_strided_slice %2 {offsets = [0, 19], sizes = [4, 1], strides = [1, 1]} : vector<4x32xf32> to vector<4x1xf32>
    %204 = vector.extract_strided_slice %5 {offsets = [19, 0], sizes = [1, 8], strides = [1, 1]} : vector<32x8xf32> to vector<1x8xf32>
    %205 = vector.broadcast %203 : vector<4x1xf32> to vector<4x8xf32>
    %206 = vector.broadcast %204 : vector<1x8xf32> to vector<4x8xf32>
    %207 = arith.addf %205, %206 : vector<4x8xf32>
    %208 = math.tanh %207 : vector<4x8xf32>
    %c19 = arith.constant 19 : index
    %209 = memref.load %arg5[%c19] : memref<32xf32, #tpu.memory_space<smem>>
    %210 = vector.broadcast %209 : f32 to vector<4x8xf32>
    %211 = arith.mulf %210, %208 : vector<4x8xf32>
    %212 = arith.addf %202, %211 : vector<4x8xf32>
    %213 = vector.extract_strided_slice %2 {offsets = [0, 20], sizes = [4, 1], strides = [1, 1]} : vector<4x32xf32> to vector<4x1xf32>
    %214 = vector.extract_strided_slice %5 {offsets = [20, 0], sizes = [1, 8], strides = [1, 1]} : vector<32x8xf32> to vector<1x8xf32>
    %215 = vector.broadcast %213 : vector<4x1xf32> to vector<4x8xf32>
    %216 = vector.broadcast %214 : vector<1x8xf32> to vector<4x8xf32>
    %217 = arith.addf %215, %216 : vector<4x8xf32>
    %218 = math.tanh %217 : vector<4x8xf32>
    %c20 = arith.constant 20 : index
    %219 = memref.load %arg5[%c20] : memref<32xf32, #tpu.memory_space<smem>>
    %220 = vector.broadcast %219 : f32 to vector<4x8xf32>
    %221 = arith.mulf %220, %218 : vector<4x8xf32>
    %222 = arith.addf %212, %221 : vector<4x8xf32>
    %223 = vector.extract_strided_slice %2 {offsets = [0, 21], sizes = [4, 1], strides = [1, 1]} : vector<4x32xf32> to vector<4x1xf32>
    %224 = vector.extract_strided_slice %5 {offsets = [21, 0], sizes = [1, 8], strides = [1, 1]} : vector<32x8xf32> to vector<1x8xf32>
    %225 = vector.broadcast %223 : vector<4x1xf32> to vector<4x8xf32>
    %226 = vector.broadcast %224 : vector<1x8xf32> to vector<4x8xf32>
    %227 = arith.addf %225, %226 : vector<4x8xf32>
    %228 = math.tanh %227 : vector<4x8xf32>
    %c21 = arith.constant 21 : index
    %229 = memref.load %arg5[%c21] : memref<32xf32, #tpu.memory_space<smem>>
    %230 = vector.broadcast %229 : f32 to vector<4x8xf32>
    %231 = arith.mulf %230, %228 : vector<4x8xf32>
    %232 = arith.addf %222, %231 : vector<4x8xf32>
    %233 = vector.extract_strided_slice %2 {offsets = [0, 22], sizes = [4, 1], strides = [1, 1]} : vector<4x32xf32> to vector<4x1xf32>
    %234 = vector.extract_strided_slice %5 {offsets = [22, 0], sizes = [1, 8], strides = [1, 1]} : vector<32x8xf32> to vector<1x8xf32>
    %235 = vector.broadcast %233 : vector<4x1xf32> to vector<4x8xf32>
    %236 = vector.broadcast %234 : vector<1x8xf32> to vector<4x8xf32>
    %237 = arith.addf %235, %236 : vector<4x8xf32>
    %238 = math.tanh %237 : vector<4x8xf32>
    %c22 = arith.constant 22 : index
    %239 = memref.load %arg5[%c22] : memref<32xf32, #tpu.memory_space<smem>>
    %240 = vector.broadcast %239 : f32 to vector<4x8xf32>
    %241 = arith.mulf %240, %238 : vector<4x8xf32>
    %242 = arith.addf %232, %241 : vector<4x8xf32>
    %243 = vector.extract_strided_slice %2 {offsets = [0, 23], sizes = [4, 1], strides = [1, 1]} : vector<4x32xf32> to vector<4x1xf32>
    %244 = vector.extract_strided_slice %5 {offsets = [23, 0], sizes = [1, 8], strides = [1, 1]} : vector<32x8xf32> to vector<1x8xf32>
    %245 = vector.broadcast %243 : vector<4x1xf32> to vector<4x8xf32>
    %246 = vector.broadcast %244 : vector<1x8xf32> to vector<4x8xf32>
    %247 = arith.addf %245, %246 : vector<4x8xf32>
    %248 = math.tanh %247 : vector<4x8xf32>
    %c23 = arith.constant 23 : index
    %249 = memref.load %arg5[%c23] : memref<32xf32, #tpu.memory_space<smem>>
    %250 = vector.broadcast %249 : f32 to vector<4x8xf32>
    %251 = arith.mulf %250, %248 : vector<4x8xf32>
    %252 = arith.addf %242, %251 : vector<4x8xf32>
    %253 = vector.extract_strided_slice %2 {offsets = [0, 24], sizes = [4, 1], strides = [1, 1]} : vector<4x32xf32> to vector<4x1xf32>
    %254 = vector.extract_strided_slice %5 {offsets = [24, 0], sizes = [1, 8], strides = [1, 1]} : vector<32x8xf32> to vector<1x8xf32>
    %255 = vector.broadcast %253 : vector<4x1xf32> to vector<4x8xf32>
    %256 = vector.broadcast %254 : vector<1x8xf32> to vector<4x8xf32>
    %257 = arith.addf %255, %256 : vector<4x8xf32>
    %258 = math.tanh %257 : vector<4x8xf32>
    %c24 = arith.constant 24 : index
    %259 = memref.load %arg5[%c24] : memref<32xf32, #tpu.memory_space<smem>>
    %260 = vector.broadcast %259 : f32 to vector<4x8xf32>
    %261 = arith.mulf %260, %258 : vector<4x8xf32>
    %262 = arith.addf %252, %261 : vector<4x8xf32>
    %263 = vector.extract_strided_slice %2 {offsets = [0, 25], sizes = [4, 1], strides = [1, 1]} : vector<4x32xf32> to vector<4x1xf32>
    %264 = vector.extract_strided_slice %5 {offsets = [25, 0], sizes = [1, 8], strides = [1, 1]} : vector<32x8xf32> to vector<1x8xf32>
    %265 = vector.broadcast %263 : vector<4x1xf32> to vector<4x8xf32>
    %266 = vector.broadcast %264 : vector<1x8xf32> to vector<4x8xf32>
    %267 = arith.addf %265, %266 : vector<4x8xf32>
    %268 = math.tanh %267 : vector<4x8xf32>
    %c25 = arith.constant 25 : index
    %269 = memref.load %arg5[%c25] : memref<32xf32, #tpu.memory_space<smem>>
    %270 = vector.broadcast %269 : f32 to vector<4x8xf32>
    %271 = arith.mulf %270, %268 : vector<4x8xf32>
    %272 = arith.addf %262, %271 : vector<4x8xf32>
    %273 = vector.extract_strided_slice %2 {offsets = [0, 26], sizes = [4, 1], strides = [1, 1]} : vector<4x32xf32> to vector<4x1xf32>
    %274 = vector.extract_strided_slice %5 {offsets = [26, 0], sizes = [1, 8], strides = [1, 1]} : vector<32x8xf32> to vector<1x8xf32>
    %275 = vector.broadcast %273 : vector<4x1xf32> to vector<4x8xf32>
    %276 = vector.broadcast %274 : vector<1x8xf32> to vector<4x8xf32>
    %277 = arith.addf %275, %276 : vector<4x8xf32>
    %278 = math.tanh %277 : vector<4x8xf32>
    %c26 = arith.constant 26 : index
    %279 = memref.load %arg5[%c26] : memref<32xf32, #tpu.memory_space<smem>>
    %280 = vector.broadcast %279 : f32 to vector<4x8xf32>
    %281 = arith.mulf %280, %278 : vector<4x8xf32>
    %282 = arith.addf %272, %281 : vector<4x8xf32>
    %283 = vector.extract_strided_slice %2 {offsets = [0, 27], sizes = [4, 1], strides = [1, 1]} : vector<4x32xf32> to vector<4x1xf32>
    %284 = vector.extract_strided_slice %5 {offsets = [27, 0], sizes = [1, 8], strides = [1, 1]} : vector<32x8xf32> to vector<1x8xf32>
    %285 = vector.broadcast %283 : vector<4x1xf32> to vector<4x8xf32>
    %286 = vector.broadcast %284 : vector<1x8xf32> to vector<4x8xf32>
    %287 = arith.addf %285, %286 : vector<4x8xf32>
    %288 = math.tanh %287 : vector<4x8xf32>
    %c27 = arith.constant 27 : index
    %289 = memref.load %arg5[%c27] : memref<32xf32, #tpu.memory_space<smem>>
    %290 = vector.broadcast %289 : f32 to vector<4x8xf32>
    %291 = arith.mulf %290, %288 : vector<4x8xf32>
    %292 = arith.addf %282, %291 : vector<4x8xf32>
    %293 = vector.extract_strided_slice %2 {offsets = [0, 28], sizes = [4, 1], strides = [1, 1]} : vector<4x32xf32> to vector<4x1xf32>
    %294 = vector.extract_strided_slice %5 {offsets = [28, 0], sizes = [1, 8], strides = [1, 1]} : vector<32x8xf32> to vector<1x8xf32>
    %295 = vector.broadcast %293 : vector<4x1xf32> to vector<4x8xf32>
    %296 = vector.broadcast %294 : vector<1x8xf32> to vector<4x8xf32>
    %297 = arith.addf %295, %296 : vector<4x8xf32>
    %298 = math.tanh %297 : vector<4x8xf32>
    %c28 = arith.constant 28 : index
    %299 = memref.load %arg5[%c28] : memref<32xf32, #tpu.memory_space<smem>>
    %300 = vector.broadcast %299 : f32 to vector<4x8xf32>
    %301 = arith.mulf %300, %298 : vector<4x8xf32>
    %302 = arith.addf %292, %301 : vector<4x8xf32>
    %303 = vector.extract_strided_slice %2 {offsets = [0, 29], sizes = [4, 1], strides = [1, 1]} : vector<4x32xf32> to vector<4x1xf32>
    %304 = vector.extract_strided_slice %5 {offsets = [29, 0], sizes = [1, 8], strides = [1, 1]} : vector<32x8xf32> to vector<1x8xf32>
    %305 = vector.broadcast %303 : vector<4x1xf32> to vector<4x8xf32>
    %306 = vector.broadcast %304 : vector<1x8xf32> to vector<4x8xf32>
    %307 = arith.addf %305, %306 : vector<4x8xf32>
    %308 = math.tanh %307 : vector<4x8xf32>
    %c29 = arith.constant 29 : index
    %309 = memref.load %arg5[%c29] : memref<32xf32, #tpu.memory_space<smem>>
    %310 = vector.broadcast %309 : f32 to vector<4x8xf32>
    %311 = arith.mulf %310, %308 : vector<4x8xf32>
    %312 = arith.addf %302, %311 : vector<4x8xf32>
    %313 = vector.extract_strided_slice %2 {offsets = [0, 30], sizes = [4, 1], strides = [1, 1]} : vector<4x32xf32> to vector<4x1xf32>
    %314 = vector.extract_strided_slice %5 {offsets = [30, 0], sizes = [1, 8], strides = [1, 1]} : vector<32x8xf32> to vector<1x8xf32>
    %315 = vector.broadcast %313 : vector<4x1xf32> to vector<4x8xf32>
    %316 = vector.broadcast %314 : vector<1x8xf32> to vector<4x8xf32>
    %317 = arith.addf %315, %316 : vector<4x8xf32>
    %318 = math.tanh %317 : vector<4x8xf32>
    %c30 = arith.constant 30 : index
    %319 = memref.load %arg5[%c30] : memref<32xf32, #tpu.memory_space<smem>>
    %320 = vector.broadcast %319 : f32 to vector<4x8xf32>
    %321 = arith.mulf %320, %318 : vector<4x8xf32>
    %322 = arith.addf %312, %321 : vector<4x8xf32>
    %323 = vector.extract_strided_slice %2 {offsets = [0, 31], sizes = [4, 1], strides = [1, 1]} : vector<4x32xf32> to vector<4x1xf32>
    %324 = vector.extract_strided_slice %5 {offsets = [31, 0], sizes = [1, 8], strides = [1, 1]} : vector<32x8xf32> to vector<1x8xf32>
    %325 = vector.broadcast %323 : vector<4x1xf32> to vector<4x8xf32>
    %326 = vector.broadcast %324 : vector<1x8xf32> to vector<4x8xf32>
    %327 = arith.addf %325, %326 : vector<4x8xf32>
    %328 = math.tanh %327 : vector<4x8xf32>
    %c31 = arith.constant 31 : index
    %329 = memref.load %arg5[%c31] : memref<32xf32, #tpu.memory_space<smem>>
    %330 = vector.broadcast %329 : f32 to vector<4x8xf32>
    %331 = arith.mulf %330, %328 : vector<4x8xf32>
    %332 = arith.addf %322, %331 : vector<4x8xf32>
    %333 = tpu.iota {dimensions = array<i32: 1>} : vector<4x8xi32>
    %334 = vector.broadcast %11 : vector<4x1xi32> to vector<4x8xi32>
    %335 = arith.cmpi slt, %333, %334 : vector<4x8xi32>
    %cst_8 = arith.constant -1.000000e+06 : f32
    %336 = vector.broadcast %cst_8 : f32 to vector<4x8xf32>
    %337 = arith.select %335, %332, %336 : vector<4x8xi1>, vector<4x8xf32>
    %cst_9 = arith.constant dense<0xFF800000> : vector<4xf32>
    %338 = vector.multi_reduction <maximumf>, %337, %cst_9 [1] : vector<4x8xf32> to vector<4xf32>
    %339 = vector.shape_cast %338 : vector<4xf32> to vector<4x1xf32>
    %340 = vector.broadcast %339 : vector<4x1xf32> to vector<4x8xf32>
    %341 = arith.subf %337, %340 : vector<4x8xf32>
    %342 = math.exp %341 : vector<4x8xf32>
    %cst_10 = arith.constant dense<0.000000e+00> : vector<4xf32>
    %343 = vector.multi_reduction <add>, %342, %cst_10 [1] : vector<4x8xf32> to vector<4xf32>
    %344 = vector.shape_cast %343 : vector<4xf32> to vector<4x1xf32>
    %345 = tpu.reciprocal %344 {approx = true} : vector<4x1xf32> -> vector<4x1xf32>
    %346 = vector.broadcast %345 : vector<4x1xf32> to vector<4x8xf32>
    %347 = arith.mulf %342, %346 : vector<4x8xf32>
    %348 = arith.index_cast %c0_i32 : i32 to index
    %c0_11 = arith.constant 0 : index
    %c0_12 = arith.constant 0 : index
    %349 = vector.load %arg7[%348, %c0_11, %c0_12] : memref<1x4x8xf32, #tpu.memory_space<vmem>>, vector<1x4x8xf32>
    %350 = vector.shape_cast %349 : vector<1x4x8xf32> to vector<4x8xf32>
    %351 = vector.shape_cast %347 : vector<4x8xf32> to vector<1x4x8xf32>
    tpu.vector_store %arg7[%348, %c0_11, %c0_12], %351 {strides = array<i32>} : memref<1x4x8xf32, #tpu.memory_space<vmem>>, vector<1x4x8xf32>,
    %cst_13 = arith.constant dense<0.000000e+00> : vector<4x24xf32>
    %352 = tpu.matmul %347, %8, %cst_13 {dimension_numbers = #tpu.dot_dimension_numbers<[1], [0], [0], [1], [0, 0, 1, 1], [], []>} : vector<4x8xf32>, vector<8x24xf32>, vector<4x24xf32> -> vector<4x24xf32>
    %353 = arith.index_cast %c0_i32 : i32 to index
    %c0_14 = arith.constant 0 : index
    %c0_15 = arith.constant 0 : index
    %354 = vector.load %arg6[%353, %c0_14, %c0_15] : memref<1x4x24xf32, #tpu.memory_space<vmem>>, vector<1x4x24xf32>
    %355 = vector.shape_cast %354 : vector<1x4x24xf32> to vector<4x24xf32>
    %356 = vector.shape_cast %352 : vector<4x24xf32> to vector<1x4x24xf32>
    tpu.vector_store %arg6[%353, %c0_14, %c0_15], %356 {strides = array<i32>} : memref<1x4x24xf32, #tpu.memory_space<vmem>>, vector<1x4x24xf32>,
    %c1_i32 = arith.constant 1 : i32
    return
  }
  func.func @transform_0(%arg0: i32) -> (i32, i32, i32) {
    %c0_i32 = arith.constant 0 : i32
    %c0_i32_0 = arith.constant 0 : i32
    %c0_i32_1 = arith.constant 0 : i32
    return %arg0, %c0_i32, %c0_i32_0 : i32, i32, i32
  }
  func.func @transform_1(%arg0: i32) -> (i32, i32, i32) {
    %c0_i32 = arith.constant 0 : i32
    %c0_i32_0 = arith.constant 0 : i32
    %c0_i32_1 = arith.constant 0 : i32
    return %arg0, %c0_i32, %c0_i32_0 : i32, i32, i32
  }
  func.func @transform_2(%arg0: i32) -> (i32, i32, i32) {
    %c0_i32 = arith.constant 0 : i32
    %c0_i32_0 = arith.constant 0 : i32
    %c0_i32_1 = arith.constant 0 : i32
    return %arg0, %c0_i32, %c0_i32_0 : i32, i32, i32
  }
  func.func @transform_3(%arg0: i32) -> (i32, i32, i32) {
    %c0_i32 = arith.constant 0 : i32
    %c0_i32_0 = arith.constant 0 : i32
    %c0_i32_1 = arith.constant 0 : i32
    return %arg0, %c0_i32, %c0_i32_0 : i32, i32, i32
  }
  func.func @transform_4(%arg0: i32) -> i32 {
    %c0_i32 = arith.constant 0 : i32
    %c0_i32_0 = arith.constant 0 : i32
    return %c0_i32 : i32
  }
  func.func @transform_5(%arg0: i32) -> (i32, i32, i32) {
    %c0_i32 = arith.constant 0 : i32
    %c0_i32_0 = arith.constant 0 : i32
    %c0_i32_1 = arith.constant 0 : i32
    return %arg0, %c0_i32, %c0_i32_0 : i32, i32, i32
  }
  func.func @transform_6(%arg0: i32) -> (i32, i32, i32) {
    %c0_i32 = arith.constant 0 : i32
    %c0_i32_0 = arith.constant 0 : i32
    %c0_i32_1 = arith.constant 0 : i32
    return %arg0, %c0_i32, %c0_i32_0 : i32, i32, i32
  }
}

</mosaic_0001>

<llo_original>
// kernel: tpu_custom_call.1
$region0: #{tpu_custom_call.1}
  #allocation0 [shape = 'u32[]', space=smem, size = 0x4, offset = 0x4, fixed_abs, tag = 'smem constant byte address 0x4 - core index']
  #allocation1 [shape = 'u32[144,128]{1,0:T(1,128)}', space=vmem, size = 0x12000, scoped, tag = 'internal scratch']
  %s0 = inlined_call_operand.vmem [shape: f32[2,4,32], index: 0, kind: input, shape index: {}]
  %s1 = inlined_call_operand.vmem [shape: f32[2,32,8], index: 1, kind: input, shape index: {}]
  %s2 = inlined_call_operand.vmem [shape: f32[2,8,24], index: 2, kind: input, shape index: {}]
  %s3 = inlined_call_operand.vmem [shape: s32[2,4,1], index: 3, kind: input, shape index: {}]
  %s4 = inlined_call_operand.vmem [shape: f32[32], index: 4, kind: input, shape index: {}]
  %s5 = inlined_call_operand.hbm [shape: f32[2,4,24], index: 5, kind: output, shape index: {0}]
  %s6 = inlined_call_operand.hbm [shape: f32[2,4,8], index: 6, kind: output, shape index: {1}]
  %7 = xla_tuple %s5, %s6
  %s8 = sld [smem:[#allocation0]]
  $region65: #{tpu_custom_call.1} parent=0
    _
  %s10 = ssub.s32 1, %s8
  %s11 = scalar_select 0, %s10, %s8
  $region1: #{tpu_custom_call.1} parent=0
    #allocation2 [shape = 'u8[512]{0}', space=smem, size = 0x200, scoped, tag = 'input window, operand 4, single buffered']
    #allocation3 [shape = 's32[2]{0}', space=sflag, size = 0x8, scoped, tag = 'scoped memory for tpu_custom_call.1']
    #allocation4 [shape = 's32[2]{0}', space=sflag, size = 0x8, scoped, tag = 'scoped memory for tpu_custom_call.1']
    #allocation5 [shape = 'u8[4096]{0}', space=vmem, size = 0x1000, scoped, tag = 'output window, operand 0']
    #allocation6 [shape = 'u8[4096]{0}', space=vmem, size = 0x1000, scoped, tag = 'output window, operand 1']
    #allocation7 [shape = 's32[2]{0}', space=sflag, size = 0x8, scoped, tag = 'scoped memory for tpu_custom_call.1']
    %12 = vsyncpa [#allocation4], 0
    %13 = vsyncpa [#allocation3], 0
    %s14 = scalar_lea.sflag [#allocation3], 1
    %15 = vsyncpa %s14, 0
    %16 = vsyncpa [#allocation7], 0
    %s17 = scalar_lea.sflag [#allocation7], 1
    %18 = vsyncpa %s17, 0
    loop: start=0, step=1, limit=4
    $region2: #{tpu_custom_call.1} parent=1 // loop_pre_header
      _
    $region3: #{tpu_custom_call.1} parent=1 // loop_header
      %s20 = sphi 0, %s24
      %p21 = scmp.ge.s32.totalorder %s20, 4
      %s30 = sphi 0, %s32
      %s33 = sphi 0, %s30
      %s34 = sphi 0, %s33
      %s50 = sphi 0, %s34
      %s56 = sphi 0, %s58
      %s59 = sphi 0, %s56
      %s60 = sphi 0, %s59
      %s76 = sphi 0, %s60
      %s82 = sphi 0, %s84
      %s85 = sphi 0, %s82
      %s86 = sphi 0, %s85
      %s102 = sphi 0, %s86
      %s108 = sphi 0, %s110
      %s111 = sphi 0, %s108
      %s112 = sphi 0, %s111
      %s128 = sphi 0, %s112
      %s132 = sphi 0, %s132
      %s134 = sphi 0, %s132
      %s135 = sphi 0, %s134
      %s149 = sphi 0, %s135
      %s155 = sphi 0, %s157
      %s158 = sphi 0, %s155
      %s159 = sphi 0, %s158
      %s175 = sphi 0, %s159
      %s181 = sphi 0, %s183
      %s184 = sphi 0, %s181
      %s185 = sphi 0, %s184
      %s201 = sphi 0, %s185
    $region4: #{tpu_custom_call.1} parent=1 // loop_header_branch
      %23 = sbr.rel (%p21) target = $region8
    $region5: #{tpu_custom_call.1} parent=1 // loop_body
      %s25 = ssub.s32 %s20, 1
      %s26 = ssub.s32 %s20, 2
      %s27 = sadd.s32 %s20, 1
      %s28 = ssub.s32 %s20, %s27
      %p29 = scmp.eq.s32.totalorder %s28, 0
      %s31 = sadd.s32 %s30, 1
      %s32 = scalar_select %p29, %s30, %s31
      %p35 = pneg %p29
      %p36 = scmp.eq.s32.totalorder %s20, 1
      %p37 = por %p35, %p36
      %p38 = scmp.ne.s32.totalorder %s30, %s33
      %p39 = scmp.eq.s32.totalorder %s20, 0
      %p40 = por %p38, %p39
      %p41 = scmp.ne.s32.totalorder %s30, %s33
      %p42 = scmp.eq.s32.totalorder %s25, 1
      %p43 = por %p41, %p42
      %p44 = scmp.ne.s32.totalorder %s33, %s34
      %p45 = scmp.eq.s32.totalorder %s25, 0
      %p46 = por %p44, %p45
      %p47 = scmp.ne.s32.totalorder %s33, %s34
      %p48 = scmp.eq.s32.totalorder %s26, 1
      %p49 = por %p47, %p48
      %p51 = scmp.ne.s32.totalorder %s34, %s50
      %p52 = scmp.eq.s32.totalorder %s26, 0
      %p53 = por %p51, %p52
      %s54 = ssub.s32 %s20, %s27
      %p55 = scmp.eq.s32.totalorder %s54, 0
      %s57 = sadd.s32 %s56, 1
      %s58 = scalar_select %p55, %s56, %s57
      %p61 = pneg %p55
      %p62 = scmp.eq.s32.totalorder %s20, 1
      %p63 = por %p61, %p62
      %p64 = scmp.ne.s32.totalorder %s56, %s59
      %p65 = scmp.eq.s32.totalorder %s20, 0
      %p66 = por %p64, %p65
      %p67 = scmp.ne.s32.totalorder %s56, %s59
      %p68 = scmp.eq.s32.totalorder %s25, 1
      %p69 = por %p67, %p68
      %p70 = scmp.ne.s32.totalorder %s59, %s60
      %p71 = scmp.eq.s32.totalorder %s25, 0
      %p72 = por %p70, %p71
      %p73 = scmp.ne.s32.totalorder %s59, %s60
      %p74 = scmp.eq.s32.totalorder %s26, 1
      %p75 = por %p73, %p74
      %p77 = scmp.ne.s32.totalorder %s60, %s76
      %p78 = scmp.eq.s32.totalorder %s26, 0
      %p79 = por %p77, %p78
      %s80 = ssub.s32 %s20, %s27
      %p81 = scmp.eq.s32.totalorder %s80, 0
      %s83 = sadd.s32 %s82, 1
      %s84 = scalar_select %p81, %s82, %s83
      %p87 = pneg %p81
      %p88 = scmp.eq.s32.totalorder %s20, 1
      %p89 = por %p87, %p88
      %p90 = scmp.ne.s32.totalorder %s82, %s85
      %p91 = scmp.eq.s32.totalorder %s20, 0
      %p92 = por %p90, %p91
      %p93 = scmp.ne.s32.totalorder %s82, %s85
      %p94 = scmp.eq.s32.totalorder %s25, 1
      %p95 = por %p93, %p94
      %p96 = scmp.ne.s32.totalorder %s85, %s86
      %p97 = scmp.eq.s32.totalorder %s25, 0
      %p98 = por %p96, %p97
      %p99 = scmp.ne.s32.totalorder %s85, %s86
      %p100 = scmp.eq.s32.totalorder %s26, 1
      %p101 = por %p99, %p100
      %p103 = scmp.ne.s32.totalorder %s86, %s102
      %p104 = scmp.eq.s32.totalorder %s26, 0
      %p105 = por %p103, %p104
      %s106 = ssub.s32 %s20, %s27
      %p107 = scmp.eq.s32.totalorder %s106, 0
      %s109 = sadd.s32 %s108, 1
      %s110 = scalar_select %p107, %s108, %s109
      %p113 = pneg %p107
      %p114 = scmp.eq.s32.totalorder %s20, 1
      %p115 = por %p113, %p114
      %p116 = scmp.ne.s32.totalorder %s108, %s111
      %p117 = scmp.eq.s32.totalorder %s20, 0
      %p118 = por %p116, %p117
      %p119 = scmp.ne.s32.totalorder %s108, %s111
      %p120 = scmp.eq.s32.totalorder %s25, 1
      %p121 = por %p119, %p120
      %p122 = scmp.ne.s32.totalorder %s111, %s112
      %p123 = scmp.eq.s32.totalorder %s25, 0
      %p124 = por %p122, %p123
      %p125 = scmp.ne.s32.totalorder %s111, %s112
      %p126 = scmp.eq.s32.totalorder %s26, 1
      %p127 = por %p125, %p126
      %p129 = scmp.ne.s32.totalorder %s112, %s128
      %p130 = scmp.eq.s32.totalorder %s26, 0
      %p131 = por %p129, %p130
      %s133 = sadd.s32 %s132, 1
      %p136 = scmp.eq.s32.totalorder %s20, 1
      %p137 = scmp.ne.s32.totalorder %s132, %s134
      %p138 = scmp.eq.s32.totalorder %s20, 0
      %p139 = por %p137, %p138
      %p140 = scmp.ne.s32.totalorder %s132, %s134
      %p141 = scmp.eq.s32.totalorder %s25, 1
      %p142 = por %p140, %p141
      %p143 = scmp.ne.s32.totalorder %s134, %s135
      %p144 = scmp.eq.s32.totalorder %s25, 0
      %p145 = por %p143, %p144
      %p146 = scmp.ne.s32.totalorder %s134, %s135
      %p147 = scmp.eq.s32.totalorder %s26, 1
      %p148 = por %p146, %p147
      %p150 = scmp.ne.s32.totalorder %s135, %s149
      %p151 = scmp.eq.s32.totalorder %s26, 0
      %p152 = por %p150, %p151
      %s153 = ssub.s32 %s20, %s27
      %p154 = scmp.eq.s32.totalorder %s153, 0
      %s156 = sadd.s32 %s155, 1
      %s157 = scalar_select %p154, %s155, %s156
      %p160 = pneg %p154
      %p161 = scmp.eq.s32.totalorder %s20, 1
      %p162 = por %p160, %p161
      %p163 = scmp.ne.s32.totalorder %s155, %s158
      %p164 = scmp.eq.s32.totalorder %s20, 0
      %p165 = por %p163, %p164
      %p166 = scmp.ne.s32.totalorder %s155, %s158
      %p167 = scmp.eq.s32.totalorder %s25, 1
      %p168 = por %p166, %p167
      %p169 = scmp.ne.s32.totalorder %s158, %s159
      %p170 = scmp.eq.s32.totalorder %s25, 0
      %p171 = por %p169, %p170
      %p172 = scmp.ne.s32.totalorder %s158, %s159
      %p173 = scmp.eq.s32.totalorder %s26, 1
      %p174 = por %p172, %p173
      %p176 = scmp.ne.s32.totalorder %s159, %s175
      %p177 = scmp.eq.s32.totalorder %s26, 0
      %p178 = por %p176, %p177
      %s179 = ssub.s32 %s20, %s27
      %p180 = scmp.eq.s32.totalorder %s179, 0
      %s182 = sadd.s32 %s181, 1
      %s183 = scalar_select %p180, %s181, %s182
      %p186 = pneg %p180
      %p187 = scmp.eq.s32.totalorder %s20, 1
      %p188 = por %p186, %p187
      %p189 = scmp.ne.s32.totalorder %s181, %s184
      %p190 = scmp.eq.s32.totalorder %s20, 0
      %p191 = por %p189, %p190
      %p192 = scmp.ne.s32.totalorder %s181, %s184
      %p193 = scmp.eq.s32.totalorder %s25, 1
      %p194 = por %p192, %p193
      %p195 = scmp.ne.s32.totalorder %s184, %s185
      %p196 = scmp.eq.s32.totalorder %s25, 0
      %p197 = por %p195, %p196
      %p198 = scmp.ne.s32.totalorder %s184, %s185
      %p199 = scmp.eq.s32.totalorder %s26, 1
      %p200 = por %p198, %p199
      %p202 = scmp.ne.s32.totalorder %s185, %s201
      %p203 = scmp.eq.s32.totalorder %s26, 0
      %p204 = por %p202, %p203
      %p205 = scmp.le.s32.totalorder 1, %s20
      %p206 = scmp.lt.s32.totalorder %s20, 3
      %p207 = pnand %p205, %p206
      %p208 = pneg %p207
      // Predicated region
      $region9: #{tpu_custom_call.1} parent=5 // pred_check
        _
      $region10: #{tpu_custom_call.1} parent=5 // pred_check_branch
        %210 = sbr.rel (%p207) target = $region12
      $region11: #{tpu_custom_call.1} parent=5 // pred_region
        %s211 = ssub.s32 %s20, 1
        // Predicated region
        $region13: #{tpu_custom_call.1} parent=11 // pred_check
          %p212 = pneg %p145
        $region14: #{tpu_custom_call.1} parent=11 // pred_check_branch
          %214 = sbr.rel (%p212) target = $region16
        $region15: #{tpu_custom_call.1} parent=11 // pred_region
          %s216 = ssub.s32 16, 16
          %217 = vsyncadd [#allocation4], %s216
          %s219 = sshll.u32 %s4, 4
          %s220 = int_to_ptr.vmem [resolvable:$true] %s219
          %222 = dma.vmem_to_smem %s220, 16, [#allocation2], [#allocation4]
        $region16: #{tpu_custom_call.1} parent=11 // pred_fallthru
          _
      $region12: #{tpu_custom_call.1} parent=5 // pred_fallthru
        _
      %p223 = scmp.lt.s32.totalorder %s20, 2
      // Predicated region
      $region17: #{tpu_custom_call.1} parent=5 // pred_check
        %p224 = pneg %p223
      $region18: #{tpu_custom_call.1} parent=5 // pred_check_branch
        %226 = sbr.rel (%p224) target = $region20
      $region19: #{tpu_custom_call.1} parent=5 // pred_region
        // Predicated region
        $region21: #{tpu_custom_call.1} parent=19 // pred_check
          %p227 = pneg %p40
        $region22: #{tpu_custom_call.1} parent=19 // pred_check_branch
          %229 = sbr.rel (%p227) target = $region24
        $region23: #{tpu_custom_call.1} parent=19 // pred_region
          %p230 = scmp.lt.s32.totalorder %s20, 1
          %s231 = scalar_select %p230, %s20, 1
          %s232 = smul.addr %s231, 4
          %s233 = scalar_lea.vmem %s0, %s232
        $region24: #{tpu_custom_call.1} parent=19 // pred_fallthru
          _
        // Predicated region
        $region25: #{tpu_custom_call.1} parent=19 // pred_check
          %p234 = pneg %p66
        $region26: #{tpu_custom_call.1} parent=19 // pred_check_branch
          %236 = sbr.rel (%p234) target = $region28
        $region27: #{tpu_custom_call.1} parent=19 // pred_region
          %p237 = scmp.lt.s32.totalorder %s20, 1
          %s238 = scalar_select %p237, %s20, 1
          %s239 = smul.addr %s238, 4
          %s240 = smul.addr %s239, 8
          %s241 = scalar_lea.vmem %s1, %s240
        $region28: #{tpu_custom_call.1} parent=19 // pred_fallthru
          _
        // Predicated region
        $region29: #{tpu_custom_call.1} parent=19 // pred_check
          %p242 = pneg %p92
        $region30: #{tpu_custom_call.1} parent=19 // pred_check_branch
          %244 = sbr.rel (%p242) target = $region32
        $region31: #{tpu_custom_call.1} parent=19 // pred_region
          %p245 = scmp.lt.s32.totalorder %s20, 1
          %s246 = scalar_select %p245, %s20, 1
          %s247 = smul.addr %s246, 8
          %s248 = scalar_lea.vmem %s2, %s247
        $region32: #{tpu_custom_call.1} parent=19 // pred_fallthru
          _
        // Predicated region
        $region33: #{tpu_custom_call.1} parent=19 // pred_check
          %p249 = pneg %p118
        $region34: #{tpu_custom_call.1} parent=19 // pred_check_branch
          %251 = sbr.rel (%p249) target = $region36
        $region35: #{tpu_custom_call.1} parent=19 // pred_region
          %p252 = scmp.lt.s32.totalorder %s20, 1
          %s253 = scalar_select %p252, %s20, 1
          %s254 = smul.addr %s253, 4
          %s255 = scalar_lea.vmem %s3, %s254
        $region36: #{tpu_custom_call.1} parent=19 // pred_fallthru
          _
      $region20: #{tpu_custom_call.1} parent=5 // pred_fallthru
        _
      %p256 = scmp.le.s32.totalorder 1, %s20
      %p257 = scmp.lt.s32.totalorder %s20, 3
      %p258 = pnand %p256, %p257
      %p259 = pneg %p258
      // Predicated region
      $region37: #{tpu_custom_call.1} parent=5 // pred_check
        _
      $region38: #{tpu_custom_call.1} parent=5 // pred_check_branch
        %261 = sbr.rel (%p258) target = $region40
      $region39: #{tpu_custom_call.1} parent=5 // pred_region
        %s262 = ssub.s32 %s20, 1
        // Predicated region
        $region41: #{tpu_custom_call.1} parent=39 // pred_check
          %p263 = pneg %p145
        $region42: #{tpu_custom_call.1} parent=39 // pred_check_branch
          %265 = sbr.rel (%p263) target = $region44
        $region43: #{tpu_custom_call.1} parent=39 // pred_region
          %266 = dma.done [#allocation4], 16
        $region44: #{tpu_custom_call.1} parent=39 // pred_fallthru
          _
        %267 = sfence
        %p268 = scmp.lt.s32.totalorder %s25, 1
        %s269 = scalar_select %p268, %s25, 1
        %s270 = smul.addr %s269, 4
        %s271 = scalar_lea.vmem %s0, %s270
        %p272 = pneg %p46
        %p273 = pneg %p43
        %p274 = scmp.lt.s32.totalorder %s25, 1
        %s275 = scalar_select %p274, %s25, 1
        %s276 = smul.addr %s275, 4
        %s277 = smul.addr %s276, 8
        %s278 = scalar_lea.vmem %s1, %s277
        %p279 = pneg %p72
        %p280 = pneg %p69
        %p281 = scmp.lt.s32.totalorder %s25, 1
        %s282 = scalar_select %p281, %s25, 1
        %s283 = smul.addr %s282, 8
        %s284 = scalar_lea.vmem %s2, %s283
        %p285 = pneg %p98
        %p286 = pneg %p95
        %p287 = scmp.lt.s32.totalorder %s25, 1
        %s288 = scalar_select %p287, %s25, 1
        %s289 = smul.addr %s288, 4
        %s290 = scalar_lea.vmem %s3, %s289
        %p291 = pneg %p124
        %p292 = pneg %p121
        %p293 = pneg %p145
        %p294 = pneg %p142
        %p295 = pneg %p171
        %p296 = pneg %p168
        %s297 = sand.u32 %s158, 1
        %s298 = scalar_lea.sflag [#allocation3], %s297
        %s299 = sand.u32 %s158, 1
        %s300 = smul.addr %s299, 4
        %s301 = scalar_lea.vmem [#allocation5], %s300
        %p302 = pneg %p197
        %p303 = pneg %p194
        %s304 = sand.u32 %s184, 1
        %s305 = scalar_lea.sflag [#allocation7], %s304
        %s306 = sand.u32 %s184, 1
        %s307 = smul.addr %s306, 4
        %s308 = scalar_lea.vmem [#allocation6], %s307
        %p309 = scmp.lt.s32.totalorder %s25, 1
        %s310 = scalar_select %p309, %s25, 1
        %s311 = smul.addr %s310, 4
        %s312 = scalar_lea.vmem %s0, %s311
        %p313 = scmp.lt.s32.totalorder %s25, 1
        %s314 = scalar_select %p313, %s25, 1
        %s315 = smul.addr %s314, 4
        %s316 = smul.addr %s315, 8
        %s317 = scalar_lea.vmem %s1, %s316
        %p318 = scmp.lt.s32.totalorder %s25, 1
        %s319 = scalar_select %p318, %s25, 1
        %s320 = smul.addr %s319, 8
        %s321 = scalar_lea.vmem %s2, %s320
        %p322 = scmp.lt.s32.totalorder %s25, 1
        %s323 = scalar_select %p322, %s25, 1
        %s324 = smul.addr %s323, 4
        %s325 = scalar_lea.vmem %s3, %s324
        %v326 = vld [vmem:[%s312] sm:$0xf]
        %v327 = vld [vmem:[%s317] sm:$0xff]
        %v328 = vld [vmem:[%s317 + $0x8] sm:$0xff]
        %v329 = vld [vmem:[%s317 + $0x10] sm:$0xff]
        %v330 = vld [vmem:[%s317 + $0x18] sm:$0xff]
        %v331 = vld [vmem:[%s321] sm:$0xff]
        %v332 = vld [vmem:[%s325] sm:$0xf]
        %334 = vset.pattern.permute.xlu0 0
        %335 = vperm.xlu0 %334, %v326
        %v336 = vpop.permute.xlu0 %335
        %v338 = vlaneseq
        %v339 = vshrl.u32 %v338, 7
        %v340 = vsub.s32 0, %v339
        %v341 = vrot.slane %v327, %v340
        %v342 = vadd.f32 %v336, %v341
        %v343 = vtanh.pop %v342
        %s344 = sld [smem:[#allocation2]]
        %v345 = vstv %s344
        %v346 = vmul.f32 %v345, %v343
        %v347 = vadd.f32 %v346, 0.0
        %348 = vset.pattern.permute.xlu0 1
        %349 = vperm.xlu0 %348, %v326
        %v350 = vpop.permute.xlu0 %349
        %v352 = vlaneseq
        %v353 = vshrl.u32 %v352, 7
        %v354 = vsub.s32 1, %v353
        %v355 = vrot.slane %v327, %v354
        %v356 = vadd.f32 %v350, %v355
        %v357 = vtanh.pop %v356
        %s358 = sld [smem:[#allocation2 + $0x1]]
        %v359 = vstv %s358
        %v360 = vmul.f32 %v359, %v357
        %v361 = vadd.f32 %v347, %v360
        %362 = vset.pattern.permute.xlu0 2
        %363 = vperm.xlu0 %362, %v326
        %v364 = vpop.permute.xlu0 %363
        %v366 = vlaneseq
        %v367 = vshrl.u32 %v366, 7
        %v368 = vsub.s32 2, %v367
        %v369 = vrot.slane %v327, %v368
        %v370 = vadd.f32 %v364, %v369
        %v371 = vtanh.pop %v370
        %s372 = sld [smem:[#allocation2 + $0x2]]
        %v373 = vstv %s372
        %v374 = vmul.f32 %v373, %v371
        %v375 = vadd.f32 %v361, %v374
        %376 = vset.pattern.permute.xlu0 3
        %377 = vperm.xlu0 %376, %v326
        %v378 = vpop.permute.xlu0 %377
        %v380 = vlaneseq
        %v381 = vshrl.u32 %v380, 7
        %v382 = vsub.s32 3, %v381
        %v383 = vrot.slane %v327, %v382
        %v384 = vadd.f32 %v378, %v383
        %v385 = vtanh.pop %v384
        %s386 = sld [smem:[#allocation2 + $0x3]]
        %v387 = vstv %s386
        %v388 = vmul.f32 %v387, %v385
        %v389 = vadd.f32 %v375, %v388
        %390 = vset.pattern.permute.xlu0 4
        %391 = vperm.xlu0 %390, %v326
        %v392 = vpop.permute.xlu0 %391
        %v394 = vlaneseq
        %v395 = vshrl.u32 %v394, 7
        %v396 = vsub.s32 4, %v395
        %v397 = vrot.slane %v327, %v396
        %v398 = vadd.f32 %v392, %v397
        %v399 = vtanh.pop %v398
        %s400 = sld [smem:[#allocation2 + $0x4]]
        %v401 = vstv %s400
        %v402 = vmul.f32 %v401, %v399
        %v403 = vadd.f32 %v389, %v402
        %404 = vset.pattern.permute.xlu0 5
        %405 = vperm.xlu0 %404, %v326
        %v406 = vpop.permute.xlu0 %405
        %v408 = vlaneseq
        %v409 = vshrl.u32 %v408, 7
        %v410 = vsub.s32 5, %v409
        %v411 = vrot.slane %v327, %v410
        %v412 = vadd.f32 %v406, %v411
        %v413 = vtanh.pop %v412
        %s414 = sld [smem:[#allocation2 + $0x5]]
        %v415 = vstv %s414
        %v416 = vmul.f32 %v415, %v413
        %v417 = vadd.f32 %v403, %v416
        %418 = vset.pattern.permute.xlu0 6
        %419 = vperm.xlu0 %418, %v326
        %v420 = vpop.permute.xlu0 %419
        %v422 = vlaneseq
        %v423 = vshrl.u32 %v422, 7
        %v424 = vsub.s32 6, %v423
        %v425 = vrot.slane %v327, %v424
        %v426 = vadd.f32 %v420, %v425
        %v427 = vtanh.pop %v426
        %s428 = sld [smem:[#allocation2 + $0x6]]
        %v429 = vstv %s428
        %v430 = vmul.f32 %v429, %v427
        %v431 = vadd.f32 %v417, %v430
        %432 = vset.pattern.permute.xlu0 7
        %433 = vperm.xlu0 %432, %v326
        %v434 = vpop.permute.xlu0 %433
        %v436 = vlaneseq
        %v437 = vshrl.u32 %v436, 7
        %v438 = vsub.s32 7, %v437
        %v439 = vrot.slane %v327, %v438
        %v440 = vadd.f32 %v434, %v439
        %v441 = vtanh.pop %v440
        %s442 = sld [smem:[#allocation2 + $0x7]]
        %v443 = vstv %s442
        %v444 = vmul.f32 %v443, %v441
        %v445 = vadd.f32 %v431, %v444
        %446 = vset.pattern.permute.xlu0 8
        %447 = vperm.xlu0 %446, %v326
        %v448 = vpop.permute.xlu0 %447
        %v450 = vlaneseq
        %v451 = vshrl.u32 %v450, 7
        %v452 = vsub.s32 0, %v451
        %v453 = vrot.slane %v328, %v452
        %v454 = vadd.f32 %v448, %v453
        %v455 = vtanh.pop %v454
        %s456 = sld [smem:[#allocation2 + $0x8]]
        %v457 = vstv %s456
        %v458 = vmul.f32 %v457, %v455
        %v459 = vadd.f32 %v445, %v458
        %460 = vset.pattern.permute.xlu0 9
        %461 = vperm.xlu0 %460, %v326
        %v462 = vpop.permute.xlu0 %461
        %v464 = vlaneseq
        %v465 = vshrl.u32 %v464, 7
        %v466 = vsub.s32 1, %v465
        %v467 = vrot.slane %v328, %v466
        %v468 = vadd.f32 %v462, %v467
        %v469 = vtanh.pop %v468
        %s470 = sld [smem:[#allocation2 + $0x9]]
        %v471 = vstv %s470
        %v472 = vmul.f32 %v471, %v469
        %v473 = vadd.f32 %v459, %v472
        %474 = vset.pattern.permute.xlu0 10
        %475 = vperm.xlu0 %474, %v326
        %v476 = vpop.permute.xlu0 %475
        %v478 = vlaneseq
        %v479 = vshrl.u32 %v478, 7
        %v480 = vsub.s32 2, %v479
        %v481 = vrot.slane %v328, %v480
        %v482 = vadd.f32 %v476, %v481
        %v483 = vtanh.pop %v482
        %s484 = sld [smem:[#allocation2 + $0xa]]
        %v485 = vstv %s484
        %v486 = vmul.f32 %v485, %v483
        %v487 = vadd.f32 %v473, %v486
        %488 = vset.pattern.permute.xlu0 11
        %489 = vperm.xlu0 %488, %v326
        %v490 = vpop.permute.xlu0 %489
        %v492 = vlaneseq
        %v493 = vshrl.u32 %v492, 7
        %v494 = vsub.s32 3, %v493
        %v495 = vrot.slane %v328, %v494
        %v496 = vadd.f32 %v490, %v495
        %v497 = vtanh.pop %v496
        %s498 = sld [smem:[#allocation2 + $0xb]]
        %v499 = vstv %s498
        %v500 = vmul.f32 %v499, %v497
        %v501 = vadd.f32 %v487, %v500
        %502 = vset.pattern.permute.xlu0 12
        %503 = vperm.xlu0 %502, %v326
        %v504 = vpop.permute.xlu0 %503
        %v506 = vlaneseq
        %v507 = vshrl.u32 %v506, 7
        %v508 = vsub.s32 4, %v507
        %v509 = vrot.slane %v328, %v508
        %v510 = vadd.f32 %v504, %v509
        %v511 = vtanh.pop %v510
        %s512 = sld [smem:[#allocation2 + $0xc]]
        %v513 = vstv %s512
        %v514 = vmul.f32 %v513, %v511
        %v515 = vadd.f32 %v501, %v514
        %516 = vset.pattern.permute.xlu0 13
        %517 = vperm.xlu0 %516, %v326
        %v518 = vpop.permute.xlu0 %517
        %v520 = vlaneseq
        %v521 = vshrl.u32 %v520, 7
        %v522 = vsub.s32 5, %v521
        %v523 = vrot.slane %v328, %v522
        %v524 = vadd.f32 %v518, %v523
        %v525 = vtanh.pop %v524
        %s526 = sld [smem:[#allocation2 + $0xd]]
        %v527 = vstv %s526
        %v528 = vmul.f32 %v527, %v525
        %v529 = vadd.f32 %v515, %v528
        %530 = vset.pattern.permute.xlu0 14
        %531 = vperm.xlu0 %530, %v326
        %v532 = vpop.permute.xlu0 %531
        %v534 = vlaneseq
        %v535 = vshrl.u32 %v534, 7
        %v536 = vsub.s32 6, %v535
        %v537 = vrot.slane %v328, %v536
        %v538 = vadd.f32 %v532, %v537
        %v539 = vtanh.pop %v538
        %s540 = sld [smem:[#allocation2 + $0xe]]
        %v541 = vstv %s540
        %v542 = vmul.f32 %v541, %v539
        %v543 = vadd.f32 %v529, %v542
        %544 = vset.pattern.permute.xlu0 15
        %545 = vperm.xlu0 %544, %v326
        %v546 = vpop.permute.xlu0 %545
        %v548 = vlaneseq
        %v549 = vshrl.u32 %v548, 7
        %v550 = vsub.s32 7, %v549
        %v551 = vrot.slane %v328, %v550
        %v552 = vadd.f32 %v546, %v551
        %v553 = vtanh.pop %v552
        %s554 = sld [smem:[#allocation2 + $0xf]]
        %v555 = vstv %s554
        %v556 = vmul.f32 %v555, %v553
        %v557 = vadd.f32 %v543, %v556
        %558 = vset.pattern.permute.xlu0 16
        %559 = vperm.xlu0 %558, %v326
        %v560 = vpop.permute.xlu0 %559
        %v562 = vlaneseq
        %v563 = vshrl.u32 %v562, 7
        %v564 = vsub.s32 0, %v563
        %v565 = vrot.slane %v329, %v564
        %v566 = vadd.f32 %v560, %v565
        %v567 = vtanh.pop %v566
        %s568 = sld [smem:[#allocation2 + $0x10]]
        %v569 = vstv %s568
        %v570 = vmul.f32 %v569, %v567
        %v571 = vadd.f32 %v557, %v570
        %572 = vset.pattern.permute.xlu0 17
        %573 = vperm.xlu0 %572, %v326
        %v574 = vpop.permute.xlu0 %573
        %v576 = vlaneseq
        %v577 = vshrl.u32 %v576, 7
        %v578 = vsub.s32 1, %v577
        %v579 = vrot.slane %v329, %v578
        %v580 = vadd.f32 %v574, %v579
        %v581 = vtanh.pop %v580
        %s582 = sld [smem:[#allocation2 + $0x11]]
        %v583 = vstv %s582
        %v584 = vmul.f32 %v583, %v581
        %v585 = vadd.f32 %v571, %v584
        %586 = vset.pattern.permute.xlu0 18
        %587 = vperm.xlu0 %586, %v326
        %v588 = vpop.permute.xlu0 %587
        %v590 = vlaneseq
        %v591 = vshrl.u32 %v590, 7
        %v592 = vsub.s32 2, %v591
        %v593 = vrot.slane %v329, %v592
        %v594 = vadd.f32 %v588, %v593
        %v595 = vtanh.pop %v594
        %s596 = sld [smem:[#allocation2 + $0x12]]
        %v597 = vstv %s596
        %v598 = vmul.f32 %v597, %v595
        %v599 = vadd.f32 %v585, %v598
        %600 = vset.pattern.permute.xlu0 19
        %601 = vperm.xlu0 %600, %v326
        %v602 = vpop.permute.xlu0 %601
        %v604 = vlaneseq
        %v605 = vshrl.u32 %v604, 7
        %v606 = vsub.s32 3, %v605
        %v607 = vrot.slane %v329, %v606
        %v608 = vadd.f32 %v602, %v607
        %v609 = vtanh.pop %v608
        %s610 = sld [smem:[#allocation2 + $0x13]]
        %v611 = vstv %s610
        %v612 = vmul.f32 %v611, %v609
        %v613 = vadd.f32 %v599, %v612
        %614 = vset.pattern.permute.xlu0 20
        %615 = vperm.xlu0 %614, %v326
        %v616 = vpop.permute.xlu0 %615
        %v618 = vlaneseq
        %v619 = vshrl.u32 %v618, 7
        %v620 = vsub.s32 4, %v619
        %v621 = vrot.slane %v329, %v620
        %v622 = vadd.f32 %v616, %v621
        %v623 = vtanh.pop %v622
        %s624 = sld [smem:[#allocation2 + $0x14]]
        %v625 = vstv %s624
        %v626 = vmul.f32 %v625, %v623
        %v627 = vadd.f32 %v613, %v626
        %628 = vset.pattern.permute.xlu0 21
        %629 = vperm.xlu0 %628, %v326
        %v630 = vpop.permute.xlu0 %629
        %v632 = vlaneseq
        %v633 = vshrl.u32 %v632, 7
        %v634 = vsub.s32 5, %v633
        %v635 = vrot.slane %v329, %v634
        %v636 = vadd.f32 %v630, %v635
        %v637 = vtanh.pop %v636
        %s638 = sld [smem:[#allocation2 + $0x15]]
        %v639 = vstv %s638
        %v640 = vmul.f32 %v639, %v637
        %v641 = vadd.f32 %v627, %v640
        %642 = vset.pattern.permute.xlu0 22
        %643 = vperm.xlu0 %642, %v326
        %v644 = vpop.permute.xlu0 %643
        %v646 = vlaneseq
        %v647 = vshrl.u32 %v646, 7
        %v648 = vsub.s32 6, %v647
        %v649 = vrot.slane %v329, %v648
        %v650 = vadd.f32 %v644, %v649
        %v651 = vtanh.pop %v650
        %s652 = sld [smem:[#allocation2 + $0x16]]
        %v653 = vstv %s652
        %v654 = vmul.f32 %v653, %v651
        %v655 = vadd.f32 %v641, %v654
        %656 = vset.pattern.permute.xlu0 23
        %657 = vperm.xlu0 %656, %v326
        %v658 = vpop.permute.xlu0 %657
        %v660 = vlaneseq
        %v661 = vshrl.u32 %v660, 7
        %v662 = vsub.s32 7, %v661
        %v663 = vrot.slane %v329, %v662
        %v664 = vadd.f32 %v658, %v663
        %v665 = vtanh.pop %v664
        %s666 = sld [smem:[#allocation2 + $0x17]]
        %v667 = vstv %s666
        %v668 = vmul.f32 %v667, %v665
        %v669 = vadd.f32 %v655, %v668
        %670 = vset.pattern.permute.xlu0 24
        %671 = vperm.xlu0 %670, %v326
        %v672 = vpop.permute.xlu0 %671
        %v674 = vlaneseq
        %v675 = vshrl.u32 %v674, 7
        %v676 = vsub.s32 0, %v675
        %v677 = vrot.slane %v330, %v676
        %v678 = vadd.f32 %v672, %v677
        %v679 = vtanh.pop %v678
        %s680 = sld [smem:[#allocation2 + $0x18]]
        %v681 = vstv %s680
        %v682 = vmul.f32 %v681, %v679
        %v683 = vadd.f32 %v669, %v682
        %684 = vset.pattern.permute.xlu0 25
        %685 = vperm.xlu0 %684, %v326
        %v686 = vpop.permute.xlu0 %685
        %v688 = vlaneseq
        %v689 = vshrl.u32 %v688, 7
        %v690 = vsub.s32 1, %v689
        %v691 = vrot.slane %v330, %v690
        %v692 = vadd.f32 %v686, %v691
        %v693 = vtanh.pop %v692
        %s694 = sld [smem:[#allocation2 + $0x19]]
        %v695 = vstv %s694
        %v696 = vmul.f32 %v695, %v693
        %v697 = vadd.f32 %v683, %v696
        %698 = vset.pattern.permute.xlu0 26
        %699 = vperm.xlu0 %698, %v326
        %v700 = vpop.permute.xlu0 %699
        %v702 = vlaneseq
        %v703 = vshrl.u32 %v702, 7
        %v704 = vsub.s32 2, %v703
        %v705 = vrot.slane %v330, %v704
        %v706 = vadd.f32 %v700, %v705
        %v707 = vtanh.pop %v706
        %s708 = sld [smem:[#allocation2 + $0x1a]]
        %v709 = vstv %s708
        %v710 = vmul.f32 %v709, %v707
        %v711 = vadd.f32 %v697, %v710
        %712 = vset.pattern.permute.xlu0 27
        %713 = vperm.xlu0 %712, %v326
        %v714 = vpop.permute.xlu0 %713
        %v716 = vlaneseq
        %v717 = vshrl.u32 %v716, 7
        %v718 = vsub.s32 3, %v717
        %v719 = vrot.slane %v330, %v718
        %v720 = vadd.f32 %v714, %v719
        %v721 = vtanh.pop %v720
        %s722 = sld [smem:[#allocation2 + $0x1b]]
        %v723 = vstv %s722
        %v724 = vmul.f32 %v723, %v721
        %v725 = vadd.f32 %v711, %v724
        %726 = vset.pattern.permute.xlu0 28
        %727 = vperm.xlu0 %726, %v326
        %v728 = vpop.permute.xlu0 %727
        %v730 = vlaneseq
        %v731 = vshrl.u32 %v730, 7
        %v732 = vsub.s32 4, %v731
        %v733 = vrot.slane %v330, %v732
        %v734 = vadd.f32 %v728, %v733
        %v735 = vtanh.pop %v734
        %s736 = sld [smem:[#allocation2 + $0x1c]]
        %v737 = vstv %s736
        %v738 = vmul.f32 %v737, %v735
        %v739 = vadd.f32 %v725, %v738
        %740 = vset.pattern.permute.xlu0 29
        %741 = vperm.xlu0 %740, %v326
        %v742 = vpop.permute.xlu0 %741
        %v744 = vlaneseq
        %v745 = vshrl.u32 %v744, 7
        %v746 = vsub.s32 5, %v745
        %v747 = vrot.slane %v330, %v746
        %v748 = vadd.f32 %v742, %v747
        %v749 = vtanh.pop %v748
        %s750 = sld [smem:[#allocation2 + $0x1d]]
        %v751 = vstv %s750
        %v752 = vmul.f32 %v751, %v749
        %v753 = vadd.f32 %v739, %v752
        %754 = vset.pattern.permute.xlu0 30
        %755 = vperm.xlu0 %754, %v326
        %v756 = vpop.permute.xlu0 %755
        %v758 = vlaneseq
        %v759 = vshrl.u32 %v758, 7
        %v760 = vsub.s32 6, %v759
        %v761 = vrot.slane %v330, %v760
        %v762 = vadd.f32 %v756, %v761
        %v763 = vtanh.pop %v762
        %s764 = sld [smem:[#allocation2 + $0x1e]]
        %v765 = vstv %s764
        %v766 = vmul.f32 %v765, %v763
        %v767 = vadd.f32 %v753, %v766
        %768 = vset.pattern.permute.xlu0 31
        %769 = vperm.xlu0 %768, %v326
        %v770 = vpop.permute.xlu0 %769
        %v772 = vlaneseq
        %v773 = vshrl.u32 %v772, 7
        %v774 = vsub.s32 7, %v773
        %v775 = vrot.slane %v330, %v774
        %v776 = vadd.f32 %v770, %v775
        %v777 = vtanh.pop %v776
        %s778 = sld [smem:[#allocation2 + $0x1f]]
        %v779 = vstv %s778
        %v780 = vmul.f32 %v779, %v777
        %v781 = vadd.f32 %v767, %v780
        %v782 = vlaneseq
        %v783 = vand.u32 %v782, 127
        %784 = vset.pattern.permute.xlu0 0
        %785 = vperm.xlu0 %784, %v332
        %v786 = vpop.permute.xlu0 %785
        %vm787 = vcmp.lt.s32.totalorder %v783, %v786
        %v788 = vsel %vm787, %v781, -1000000.0
        %vm789 = vcmask 60416
        %v790 = vsel %vm789, %v788, -inf
        %791 = vmax.xlane.f32.xlu0 %v790
        %v792 = vpop.xlane.xlu0 %791
        %v793 = vsub.f32 %v788, %v792
        %v794 = vmul.f32 %v793, 1.442695
        %v795 = vpow.pop %v794
        %v796 = vsel %vm789, %v795, 0.0
        %797 = vadd.xlane.f32.xlu0 %v796
        %v798 = vpop.xlane.xlu0 %797
        %v799 = vrcp.pop %v798
        %v800 = vmul.f32 %v795, %v799
        %801 = vst.msk [vmem:[%s308] sm:$0xf] %vm789, %v800
        %vm802 = vcmask 64512
        %v804 = vsel %vm802, %v800, 0
        %806 = vmatprep.subr.mxu0 0.0
        %807 = vmatpush1.msra.mxu0 0.0
        %808 = vmatprep.subr.mxu0 0.0
        %809 = vmatpush1.msra.mxu0 0.0
        %810 = vmatprep.subr.mxu0 0.0
        %811 = vmatpush1.msra.mxu0 0.0
        %812 = vmatprep.subr.mxu0 0.0
        %813 = vmatpush1.msra.mxu0 0.0
        %814 = vmatprep.subr.mxu0 0.0
        %815 = vmatpush1.msra.mxu0 0.0
        %816 = vmatprep.subr.mxu0 0.0
        %817 = vmatpush1.msra.mxu0 0.0
        %818 = vmatprep.subr.mxu0 0.0
        %819 = vmatpush1.msra.mxu0 0.0
        %820 = vmatprep.subr.mxu0 0.0
        %821 = vmatpush1.msra.mxu0 0.0
        %822 = vmatprep.subr.mxu0 0.0
        %823 = vmatpush1.msra.mxu0 0.0
        %824 = vmatprep.subr.mxu0 0.0
        %825 = vmatpush1.msra.mxu0 0.0
        %826 = vmatprep.subr.mxu0 0.0
        %827 = vmatpush1.msra.mxu0 0.0
        %828 = vmatprep.subr.mxu0 0.0
        %829 = vmatpush1.msra.mxu0 0.0
        %830 = vmatprep.subr.mxu0 0.0
        %831 = vmatpush1.msra.mxu0 0.0
        %832 = vmatprep.subr.mxu0 0.0
        %833 = vmatpush1.msra.mxu0 0.0
        %834 = vmatprep.subr.mxu0 0.0
        %835 = vmatpush1.msra.mxu0 0.0
        %836 = vmatprep.subr.mxu0 0.0
        %837 = vmatpush1.msra.mxu0 %v331
        %838 = vmatprep.subr.mxu0 0.0
        %839 = vmatpush2.msra.mxu0 0.0
        %840 = vmatprep.subr.mxu0 0.0
        %841 = vmatpush2.msra.mxu0 0.0
        %842 = vmatprep.subr.mxu0 0.0
        %843 = vmatpush2.msra.mxu0 0.0
        %844 = vmatprep.subr.mxu0 0.0
        %845 = vmatpush2.msra.mxu0 0.0
        %846 = vmatprep.subr.mxu0 0.0
        %847 = vmatpush2.msra.mxu0 0.0
        %848 = vmatprep.subr.mxu0 0.0
        %849 = vmatpush2.msra.mxu0 0.0
        %850 = vmatprep.subr.mxu0 0.0
        %851 = vmatpush2.msra.mxu0 0.0
        %852 = vmatprep.subr.mxu0 0.0
        %853 = vmatpush2.msra.mxu0 0.0
        %854 = vmatprep.subr.mxu0 0.0
        %855 = vmatpush2.msra.mxu0 0.0
        %856 = vmatprep.subr.mxu0 0.0
        %857 = vmatpush2.msra.mxu0 0.0
        %858 = vmatprep.subr.mxu0 0.0
        %859 = vmatpush2.msra.mxu0 0.0
        %860 = vmatprep.subr.mxu0 0.0
        %861 = vmatpush2.msra.mxu0 0.0
        %862 = vmatprep.subr.mxu0 0.0
        %863 = vmatpush2.msra.mxu0 0.0
        %864 = vmatprep.subr.mxu0 0.0
        %865 = vmatpush2.msra.mxu0 0.0
        %866 = vmatprep.subr.mxu0 0.0
        %867 = vmatpush2.msra.mxu0 0.0
        %868 = vmatprep.subr.mxu0 0.0
        %869 = vmatpush2.msra.mxu0 0.0
        %870 = vmatprep.mubr.f32.mxu0 0.0
        %871 = vmatmul.mubr.f32.gmra.mxu0 %v804
        %v872 = vpop.f32.mrf.mxu0
        %v873 = vadd.f32 0.0, %v872
        %v874 = vpop.f32.mrf.mxu0
        %875 = vdwg.mxu0
        %vm876 = vcmask 191488
        %877 = vst.msk [vmem:[%s301] sm:$0xf] %vm876, %v873
        %s878 = sand.u32 %s158, 1
        %s879 = scalar_lea.sflag [#allocation3], %s878
        %s880 = sand.u32 %s158, 1
        %s881 = smul.addr %s880, 4
        %s882 = scalar_lea.vmem [#allocation5], %s881
        %s883 = sand.u32 %s184, 1
        %s884 = scalar_lea.sflag [#allocation7], %s883
        %s885 = sand.u32 %s184, 1
        %s886 = smul.addr %s885, 4
        %s887 = scalar_lea.vmem [#allocation6], %s886
        // Predicated region
        $region45: #{tpu_custom_call.1} parent=39 // pred_check
          %p888 = pneg %p168
        $region46: #{tpu_custom_call.1} parent=39 // pred_check_branch
          %890 = sbr.rel (%p888) target = $region48
        $region47: #{tpu_custom_call.1} parent=39 // pred_region
          %s892 = ssub.s32 64, 64
          %893 = vsyncadd %s879, %s892
          %s894 = smul.addr %s25, 64
          %s895 = scalar_lea.hbm %s5, %s894
          %s897 = sshll.u32 %s882, 4
          %s898 = int_to_ptr.vmem [resolvable:$true] %s897
          %900 = dma.vmem_to_hbm [thread:$0]  %s898, 64, %s895, %s879
        $region48: #{tpu_custom_call.1} parent=39 // pred_fallthru
          _
        // Predicated region
        $region49: #{tpu_custom_call.1} parent=39 // pred_check
          %p901 = pneg %p194
        $region50: #{tpu_custom_call.1} parent=39 // pred_check_branch
          %903 = sbr.rel (%p901) target = $region52
        $region51: #{tpu_custom_call.1} parent=39 // pred_region
          %s905 = ssub.s32 64, 64
          %906 = vsyncadd %s884, %s905
          %s907 = smul.addr %s25, 64
          %s908 = scalar_lea.hbm %s6, %s907
          %s910 = sshll.u32 %s887, 4
          %s911 = int_to_ptr.vmem [resolvable:$true] %s910
          %913 = dma.vmem_to_hbm [thread:$0]  %s911, 64, %s908, %s884
        $region52: #{tpu_custom_call.1} parent=39 // pred_fallthru
          _
      $region40: #{tpu_custom_call.1} parent=5 // pred_fallthru
        _
      %p914 = scmp.le.s32.totalorder 2, %s20
      // Predicated region
      $region53: #{tpu_custom_call.1} parent=5 // pred_check
        %p915 = pneg %p914
      $region54: #{tpu_custom_call.1} parent=5 // pred_check_branch
        %917 = sbr.rel (%p915) target = $region56
      $region55: #{tpu_custom_call.1} parent=5 // pred_region
        %s918 = ssub.s32 %s20, 2
        // Predicated region
        $region57: #{tpu_custom_call.1} parent=55 // pred_check
          %p919 = pneg %p174
        $region58: #{tpu_custom_call.1} parent=55 // pred_check_branch
          %921 = sbr.rel (%p919) target = $region60
        $region59: #{tpu_custom_call.1} parent=55 // pred_region
          %s922 = sand.u32 %s159, 1
          %s923 = scalar_lea.sflag [#allocation3], %s922
          %s924 = sand.u32 %s159, 1
          %s925 = smul.addr %s924, 4
          %s926 = scalar_lea.vmem [#allocation5], %s925
          %927 = dma.done %s923, 64
        $region60: #{tpu_custom_call.1} parent=55 // pred_fallthru
          _
        // Predicated region
        $region61: #{tpu_custom_call.1} parent=55 // pred_check
          %p928 = pneg %p200
        $region62: #{tpu_custom_call.1} parent=55 // pred_check_branch
          %930 = sbr.rel (%p928) target = $region64
        $region63: #{tpu_custom_call.1} parent=55 // pred_region
          %s931 = sand.u32 %s185, 1
          %s932 = scalar_lea.sflag [#allocation7], %s931
          %s933 = sand.u32 %s185, 1
          %s934 = smul.addr %s933, 4
          %s935 = scalar_lea.vmem [#allocation6], %s934
          %936 = dma.done %s932, 64
        $region64: #{tpu_custom_call.1} parent=55 // pred_fallthru
          _
      $region56: #{tpu_custom_call.1} parent=5 // pred_fallthru
        _
    $region6: #{tpu_custom_call.1} parent=1 // loop_footer
      %s24 = sadd.s32 1, %s20
    $region7: #{tpu_custom_call.1} parent=1 // loop_footer_branch
      %19 = sbr.rel target = $region3
    $region8: #{tpu_custom_call.1} parent=1 // loop_exit
      _
    %937 = vsyncpa [#allocation3], 1
    %s938 = scalar_lea.sflag [#allocation3], 1
    %939 = vsyncpa %s938, 1
    %940 = vsyncpa [#allocation7], 1
    %s941 = scalar_lea.sflag [#allocation7], 1
    %942 = vsyncpa %s941, 1
    %943 = vsyncpa [#allocation4], 1
    %s944 = scalar_lea.sflag [#allocation4], 1
    %945 = vsyncpa %s944, 1

</llo_original>
